<compile_context>
chip_gen: v7x
topology: tpu7x:2x2x1
jax: 0.10.0
libtpu: 0.0.40
codegen_flags: <defaults>
</compile_context>

<pallas_src>
import jax
import jax.numpy as jnp
from jax import lax
from jax.experimental import pallas as pl
from jax.experimental.pallas import tpu as pltpu


def conv_bn_kernel(w_ref, shift_ref, x_ref, out_ref):
    """Processes one lane-packed image group.

    w_ref:     SMEM (C*C*9,)          BN-folded conv weights, flattened OIHW order
    shift_ref: SMEM (C,)              folded BN shift = beta - mean * gamma/sqrt(var+eps)
    x_ref:     VMEM (1, C, H, Wp)     packed input slab, Wp = NB*W + 2 (2 zero pad cols)
    out_ref:   VMEM (1, C, Ho, Wout)  packed output slab, Ho = H-2, Wout = NB*W
    """
    _, C_in, H, Wp = x_ref.shape
    C_out, Ho, Wout = out_ref.shape[1], out_ref.shape[2], out_ref.shape[3]

    # One f32 accumulator slab per output channel, initialized with the folded
    # BN shift (scalar splat from SMEM).  Slabs are lane-dense (NB*W wide).
    accs = [jnp.full((Ho, Wout), shift_ref[co], dtype=jnp.float32)
            for co in range(C_out)]

    for ci in range(C_in):
        x_c = x_ref[0, ci]                               # (H, Wp): loaded once per channel
        for dh in range(3):
            for dw in range(3):
                patch = x_c[dh:dh + Ho, dw:dw + Wout]    # static shifted slab
                for co in range(C_out):
                    # Each folded weight is read from SMEM exactly once per
                    # grid step (batch loop moved to lanes/grid, so no re-reads).
                    w = w_ref[((co * C_in + ci) * 3 + dh) * 3 + dw]
                    accs[co] = accs[co] + w * patch      # VPU MAC on wide slab

    for co in range(C_out):
        out_ref[0, co] = accs[co].astype(out_ref.dtype)


def _pick_images_per_block(N, C, H, W):
    """Images packed per grid step: divisor of N, VMEM-capped, lane-dense."""
    Ho = H - 2
    bytes_per_img = 4 * C * (H * W + Ho * W)               # f32 input + output slabs
    vmem_budget = 16 << 20                                 # headroom under 32 MiB scoped default
    cap = max(1, vmem_budget // (2 * bytes_per_img))       # x2: double-buffered pipeline
    divisors = [d for d in range(1, N + 1) if N % d == 0]
    fit = [d for d in divisors if d <= cap] or [min(divisors)]
    nb = max(fit)                                          # one big block: best on single-TC v5e/v6e
    if N // nb < 2:
        # Dual-TC v7x prefers >=2 grid steps, but never at the cost of
        # dropping below full 128-lane slabs.
        smaller = [d for d in fit if d < nb and N // d >= 2 and d * W >= 128]
        if smaller:
            nb = max(smaller)
    return nb


def mock_module_forward(x_nchw, w_oihw, gamma, beta, running_mean, running_var,
                        eps=1e-5, images_per_block=None):
    """Conv2d(C, C, 3, bias=False) followed by BatchNorm2d(C) (eval mode).

    x_nchw: (N, C, H, W) float32, PyTorch layout.
    Returns (N, C, H-2, W-2) float32.
    """
    N, C, H, W = x_nchw.shape
    Ho, Wo = H - 2, W - 2

    NB = images_per_block if images_per_block is not None else _pick_images_per_block(N, C, H, W)
    assert N % NB == 0, "images_per_block must divide N"
    G = N // NB
    Wout = NB * W
    Wp = Wout + 2                        # 2 zero pad columns: keeps edge taps in-bounds

    # --- wrapper-side BN folding (one-time O(9*C^2) work) ---
    scale = (gamma / jnp.sqrt(running_var + eps)).astype(jnp.float32)        # (C,)
    w_folded = w_oihw.astype(jnp.float32) * scale[:, None, None, None]       # OIHW
    w_flat = w_folded.reshape(-1)                                            # (C*C*9,)
    shift = (beta - running_mean * scale).astype(jnp.float32)                # (C,)

    # --- lane-dense packing: NCHW -> (G, C, H, NB*W) + 2 pad columns ---
    x_packed = (x_nchw.astype(jnp.float32)
                .reshape(G, NB, C, H, W)
                .transpose(0, 2, 3, 1, 4)
                .reshape(G, C, H, Wout))
    x_packed = jnp.pad(x_packed, ((0, 0), (0, 0), (0, 0), (0, 2)))

    y_packed = pl.pallas_call(
        conv_bn_kernel,
        out_shape=jax.ShapeDtypeStruct((G, C, Ho, Wout), jnp.float32),
        grid=(G,),
        in_specs=[
            pl.BlockSpec(memory_space=pltpu.MemorySpace.SMEM),   # folded weights
            pl.BlockSpec(memory_space=pltpu.MemorySpace.SMEM),   # folded shift
            pl.BlockSpec((1, C, H, Wp), lambda g: (g, 0, 0, 0)),
        ],
        out_specs=pl.BlockSpec((1, C, Ho, Wout), lambda g: (g, 0, 0, 0)),
        compiler_params=pltpu.CompilerParams(
            dimension_semantics=("parallel",)),
    )(w_flat, shift, x_packed)

    # --- unpack: (G, C, Ho, NB*W) -> (N, C, Ho, Wo), dropping the 2 invalid
    # columns per image (taps that crossed an image boundary / the pad) ---
    y = (y_packed.reshape(G, C, Ho, NB, W)
         .transpose(0, 3, 1, 2, 4)
         .reshape(N, C, Ho, W)[..., :Wo])
    return y


if __name__ == "__main__":
    channels = 4
    N, H, W = 2, 16, 16

    key = jax.random.PRNGKey(0)
    kx, kw = jax.random.split(key)

    # Input (PyTorch NCHW) and deterministic parameters.
    x = jax.random.normal(kx, (N, channels, H, W), dtype=jnp.float32)
    w = 0.1 * jax.random.normal(kw, (channels, channels, 3, 3), dtype=jnp.float32)
    gamma = 1.0 + 0.1 * jnp.arange(channels, dtype=jnp.float32)
    beta = 0.05 * jnp.arange(channels, dtype=jnp.float32)
    running_mean = 0.01 * jnp.arange(channels, dtype=jnp.float32)
    running_var = 1.0 + 0.02 * jnp.arange(channels, dtype=jnp.float32)
    eps = 1e-5

    out = mock_module_forward(x, w, gamma, beta, running_mean, running_var, eps)
    out = jax.block_until_ready(out)

    # Pure-JAX reference (valid conv + eval-mode BN) for a correctness check.
    ref_conv = lax.conv_general_dilated(
        x, w, window_strides=(1, 1), padding="VALID",
        dimension_numbers=("NCHW", "OIHW", "NCHW"),
        precision=lax.Precision.HIGHEST)
    s = gamma / jnp.sqrt(running_var + eps)
    ref = ref_conv * s[None, :, None, None] + (beta - running_mean * s)[None, :, None, None]

    assert out.shape == (N, channels, H - 2, W - 2)
    assert jnp.allclose(out, ref, rtol=1e-4, atol=1e-4), "mismatch vs reference"

    print("KERNEL_OK")
</pallas_src>

<mosaic_0001>
module attributes {stable_mosaic.version = 11 : i64} {
  func.func @conv_bn_kernel(%arg0: i32, %arg1: memref<144xf32, #tpu.memory_space<smem>>, %arg2: memref<4xf32, #tpu.memory_space<smem>>, %arg3: memref<1x4x16x34xf32, #tpu.memory_space<vmem>>, %arg4: memref<1x4x14x32xf32, #tpu.memory_space<vmem>>) attributes {dimension_semantics = [#tpu.dimension_semantics<parallel>], iteration_bounds = array<i64: 1>, scalar_prefetch = 0 : i64, scratch_operands = 0 : i64, tpu.core_type = #tpu.core_type<tc>, window_params = [{transform_indices = @transform_0, window_bounds = array<i64: 144>}, {transform_indices = @transform_1, window_bounds = array<i64: 4>}, {transform_indices = @transform_2, window_bounds = array<i64: 1, 4, 16, 34>}, {transform_indices = @transform_3, window_bounds = array<i64: 1, 4, 14, 32>}]} {
    %c0 = arith.constant 0 : index
    %0 = memref.load %arg2[%c0] : memref<4xf32, #tpu.memory_space<smem>>
    %1 = vector.broadcast %0 : f32 to vector<14x32xf32>
    %c1 = arith.constant 1 : index
    %2 = memref.load %arg2[%c1] : memref<4xf32, #tpu.memory_space<smem>>
    %3 = vector.broadcast %2 : f32 to vector<14x32xf32>
    %c2 = arith.constant 2 : index
    %4 = memref.load %arg2[%c2] : memref<4xf32, #tpu.memory_space<smem>>
    %5 = vector.broadcast %4 : f32 to vector<14x32xf32>
    %c3 = arith.constant 3 : index
    %6 = memref.load %arg2[%c3] : memref<4xf32, #tpu.memory_space<smem>>
    %7 = vector.broadcast %6 : f32 to vector<14x32xf32>
    %c0_0 = arith.constant 0 : index
    %c0_1 = arith.constant 0 : index
    %c0_2 = arith.constant 0 : index
    %c0_3 = arith.constant 0 : index
    %8 = vector.load %arg3[%c0_0, %c0_1, %c0_2, %c0_3] : memref<1x4x16x34xf32, #tpu.memory_space<vmem>>, vector<1x1x16x34xf32>
    %9 = vector.shape_cast %8 : vector<1x1x16x34xf32> to vector<16x34xf32>
    %10 = vector.extract_strided_slice %9 {offsets = [0, 0], sizes = [14, 32], strides = [1, 1]} : vector<16x34xf32> to vector<14x32xf32>
    %c0_4 = arith.constant 0 : index
    %11 = memref.load %arg1[%c0_4] : memref<144xf32, #tpu.memory_space<smem>>
    %12 = vector.broadcast %11 : f32 to vector<14x32xf32>
    %13 = arith.mulf %12, %10 : vector<14x32xf32>
    %14 = arith.addf %1, %13 : vector<14x32xf32>
    %c36 = arith.constant 36 : index
    %15 = memref.load %arg1[%c36] : memref<144xf32, #tpu.memory_space<smem>>
    %16 = vector.broadcast %15 : f32 to vector<14x32xf32>
    %17 = arith.mulf %16, %10 : vector<14x32xf32>
    %18 = arith.addf %3, %17 : vector<14x32xf32>
    %c72 = arith.constant 72 : index
    %19 = memref.load %arg1[%c72] : memref<144xf32, #tpu.memory_space<smem>>
    %20 = vector.broadcast %19 : f32 to vector<14x32xf32>
    %21 = arith.mulf %20, %10 : vector<14x32xf32>
    %22 = arith.addf %5, %21 : vector<14x32xf32>
    %c108 = arith.constant 108 : index
    %23 = memref.load %arg1[%c108] : memref<144xf32, #tpu.memory_space<smem>>
    %24 = vector.broadcast %23 : f32 to vector<14x32xf32>
    %25 = arith.mulf %24, %10 : vector<14x32xf32>
    %26 = arith.addf %7, %25 : vector<14x32xf32>
    %27 = vector.extract_strided_slice %9 {offsets = [0, 1], sizes = [14, 32], strides = [1, 1]} : vector<16x34xf32> to vector<14x32xf32>
    %c1_5 = arith.constant 1 : index
    %28 = memref.load %arg1[%c1_5] : memref<144xf32, #tpu.memory_space<smem>>
    %29 = vector.broadcast %28 : f32 to vector<14x32xf32>
    %30 = arith.mulf %29, %27 : vector<14x32xf32>
    %31 = arith.addf %14, %30 : vector<14x32xf32>
    %c37 = arith.constant 37 : index
    %32 = memref.load %arg1[%c37] : memref<144xf32, #tpu.memory_space<smem>>
    %33 = vector.broadcast %32 : f32 to vector<14x32xf32>
    %34 = arith.mulf %33, %27 : vector<14x32xf32>
    %35 = arith.addf %18, %34 : vector<14x32xf32>
    %c73 = arith.constant 73 : index
    %36 = memref.load %arg1[%c73] : memref<144xf32, #tpu.memory_space<smem>>
    %37 = vector.broadcast %36 : f32 to vector<14x32xf32>
    %38 = arith.mulf %37, %27 : vector<14x32xf32>
    %39 = arith.addf %22, %38 : vector<14x32xf32>
    %c109 = arith.constant 109 : index
    %40 = memref.load %arg1[%c109] : memref<144xf32, #tpu.memory_space<smem>>
    %41 = vector.broadcast %40 : f32 to vector<14x32xf32>
    %42 = arith.mulf %41, %27 : vector<14x32xf32>
    %43 = arith.addf %26, %42 : vector<14x32xf32>
    %44 = vector.extract_strided_slice %9 {offsets = [0, 2], sizes = [14, 32], strides = [1, 1]} : vector<16x34xf32> to vector<14x32xf32>
    %c2_6 = arith.constant 2 : index
    %45 = memref.load %arg1[%c2_6] : memref<144xf32, #tpu.memory_space<smem>>
    %46 = vector.broadcast %45 : f32 to vector<14x32xf32>
    %47 = arith.mulf %46, %44 : vector<14x32xf32>
    %48 = arith.addf %31, %47 : vector<14x32xf32>
    %c38 = arith.constant 38 : index
    %49 = memref.load %arg1[%c38] : memref<144xf32, #tpu.memory_space<smem>>
    %50 = vector.broadcast %49 : f32 to vector<14x32xf32>
    %51 = arith.mulf %50, %44 : vector<14x32xf32>
    %52 = arith.addf %35, %51 : vector<14x32xf32>
    %c74 = arith.constant 74 : index
    %53 = memref.load %arg1[%c74] : memref<144xf32, #tpu.memory_space<smem>>
    %54 = vector.broadcast %53 : f32 to vector<14x32xf32>
    %55 = arith.mulf %54, %44 : vector<14x32xf32>
    %56 = arith.addf %39, %55 : vector<14x32xf32>
    %c110 = arith.constant 110 : index
    %57 = memref.load %arg1[%c110] : memref<144xf32, #tpu.memory_space<smem>>
    %58 = vector.broadcast %57 : f32 to vector<14x32xf32>
    %59 = arith.mulf %58, %44 : vector<14x32xf32>
    %60 = arith.addf %43, %59 : vector<14x32xf32>
    %61 = vector.extract_strided_slice %9 {offsets = [1, 0], sizes = [14, 32], strides = [1, 1]} : vector<16x34xf32> to vector<14x32xf32>
    %c3_7 = arith.constant 3 : index
    %62 = memref.load %arg1[%c3_7] : memref<144xf32, #tpu.memory_space<smem>>
    %63 = vector.broadcast %62 : f32 to vector<14x32xf32>
    %64 = arith.mulf %63, %61 : vector<14x32xf32>
    %65 = arith.addf %48, %64 : vector<14x32xf32>
    %c39 = arith.constant 39 : index
    %66 = memref.load %arg1[%c39] : memref<144xf32, #tpu.memory_space<smem>>
    %67 = vector.broadcast %66 : f32 to vector<14x32xf32>
    %68 = arith.mulf %67, %61 : vector<14x32xf32>
    %69 = arith.addf %52, %68 : vector<14x32xf32>
    %c75 = arith.constant 75 : index
    %70 = memref.load %arg1[%c75] : memref<144xf32, #tpu.memory_space<smem>>
    %71 = vector.broadcast %70 : f32 to vector<14x32xf32>
    %72 = arith.mulf %71, %61 : vector<14x32xf32>
    %73 = arith.addf %56, %72 : vector<14x32xf32>
    %c111 = arith.constant 111 : index
    %74 = memref.load %arg1[%c111] : memref<144xf32, #tpu.memory_space<smem>>
    %75 = vector.broadcast %74 : f32 to vector<14x32xf32>
    %76 = arith.mulf %75, %61 : vector<14x32xf32>
    %77 = arith.addf %60, %76 : vector<14x32xf32>
    %78 = vector.extract_strided_slice %9 {offsets = [1, 1], sizes = [14, 32], strides = [1, 1]} : vector<16x34xf32> to vector<14x32xf32>
    %c4 = arith.constant 4 : index
    %79 = memref.load %arg1[%c4] : memref<144xf32, #tpu.memory_space<smem>>
    %80 = vector.broadcast %79 : f32 to vector<14x32xf32>
    %81 = arith.mulf %80, %78 : vector<14x32xf32>
    %82 = arith.addf %65, %81 : vector<14x32xf32>
    %c40 = arith.constant 40 : index
    %83 = memref.load %arg1[%c40] : memref<144xf32, #tpu.memory_space<smem>>
    %84 = vector.broadcast %83 : f32 to vector<14x32xf32>
    %85 = arith.mulf %84, %78 : vector<14x32xf32>
    %86 = arith.addf %69, %85 : vector<14x32xf32>
    %c76 = arith.constant 76 : index
    %87 = memref.load %arg1[%c76] : memref<144xf32, #tpu.memory_space<smem>>
    %88 = vector.broadcast %87 : f32 to vector<14x32xf32>
    %89 = arith.mulf %88, %78 : vector<14x32xf32>
    %90 = arith.addf %73, %89 : vector<14x32xf32>
    %c112 = arith.constant 112 : index
    %91 = memref.load %arg1[%c112] : memref<144xf32, #tpu.memory_space<smem>>
    %92 = vector.broadcast %91 : f32 to vector<14x32xf32>
    %93 = arith.mulf %92, %78 : vector<14x32xf32>
    %94 = arith.addf %77, %93 : vector<14x32xf32>
    %95 = vector.extract_strided_slice %9 {offsets = [1, 2], sizes = [14, 32], strides = [1, 1]} : vector<16x34xf32> to vector<14x32xf32>
    %c5 = arith.constant 5 : index
    %96 = memref.load %arg1[%c5] : memref<144xf32, #tpu.memory_space<smem>>
    %97 = vector.broadcast %96 : f32 to vector<14x32xf32>
    %98 = arith.mulf %97, %95 : vector<14x32xf32>
    %99 = arith.addf %82, %98 : vector<14x32xf32>
    %c41 = arith.constant 41 : index
    %100 = memref.load %arg1[%c41] : memref<144xf32, #tpu.memory_space<smem>>
    %101 = vector.broadcast %100 : f32 to vector<14x32xf32>
    %102 = arith.mulf %101, %95 : vector<14x32xf32>
    %103 = arith.addf %86, %102 : vector<14x32xf32>
    %c77 = arith.constant 77 : index
    %104 = memref.load %arg1[%c77] : memref<144xf32, #tpu.memory_space<smem>>
    %105 = vector.broadcast %104 : f32 to vector<14x32xf32>
    %106 = arith.mulf %105, %95 : vector<14x32xf32>
    %107 = arith.addf %90, %106 : vector<14x32xf32>
    %c113 = arith.constant 113 : index
    %108 = memref.load %arg1[%c113] : memref<144xf32, #tpu.memory_space<smem>>
    %109 = vector.broadcast %108 : f32 to vector<14x32xf32>
    %110 = arith.mulf %109, %95 : vector<14x32xf32>
    %111 = arith.addf %94, %110 : vector<14x32xf32>
    %112 = vector.extract_strided_slice %9 {offsets = [2, 0], sizes = [14, 32], strides = [1, 1]} : vector<16x34xf32> to vector<14x32xf32>
    %c6 = arith.constant 6 : index
    %113 = memref.load %arg1[%c6] : memref<144xf32, #tpu.memory_space<smem>>
    %114 = vector.broadcast %113 : f32 to vector<14x32xf32>
    %115 = arith.mulf %114, %112 : vector<14x32xf32>
    %116 = arith.addf %99, %115 : vector<14x32xf32>
    %c42 = arith.constant 42 : index
    %117 = memref.load %arg1[%c42] : memref<144xf32, #tpu.memory_space<smem>>
    %118 = vector.broadcast %117 : f32 to vector<14x32xf32>
    %119 = arith.mulf %118, %112 : vector<14x32xf32>
    %120 = arith.addf %103, %119 : vector<14x32xf32>
    %c78 = arith.constant 78 : index
    %121 = memref.load %arg1[%c78] : memref<144xf32, #tpu.memory_space<smem>>
    %122 = vector.broadcast %121 : f32 to vector<14x32xf32>
    %123 = arith.mulf %122, %112 : vector<14x32xf32>
    %124 = arith.addf %107, %123 : vector<14x32xf32>
    %c114 = arith.constant 114 : index
    %125 = memref.load %arg1[%c114] : memref<144xf32, #tpu.memory_space<smem>>
    %126 = vector.broadcast %125 : f32 to vector<14x32xf32>
    %127 = arith.mulf %126, %112 : vector<14x32xf32>
    %128 = arith.addf %111, %127 : vector<14x32xf32>
    %129 = vector.extract_strided_slice %9 {offsets = [2, 1], sizes = [14, 32], strides = [1, 1]} : vector<16x34xf32> to vector<14x32xf32>
    %c7 = arith.constant 7 : index
    %130 = memref.load %arg1[%c7] : memref<144xf32, #tpu.memory_space<smem>>
    %131 = vector.broadcast %130 : f32 to vector<14x32xf32>
    %132 = arith.mulf %131, %129 : vector<14x32xf32>
    %133 = arith.addf %116, %132 : vector<14x32xf32>
    %c43 = arith.constant 43 : index
    %134 = memref.load %arg1[%c43] : memref<144xf32, #tpu.memory_space<smem>>
    %135 = vector.broadcast %134 : f32 to vector<14x32xf32>
    %136 = arith.mulf %135, %129 : vector<14x32xf32>
    %137 = arith.addf %120, %136 : vector<14x32xf32>
    %c79 = arith.constant 79 : index
    %138 = memref.load %arg1[%c79] : memref<144xf32, #tpu.memory_space<smem>>
    %139 = vector.broadcast %138 : f32 to vector<14x32xf32>
    %140 = arith.mulf %139, %129 : vector<14x32xf32>
    %141 = arith.addf %124, %140 : vector<14x32xf32>
    %c115 = arith.constant 115 : index
    %142 = memref.load %arg1[%c115] : memref<144xf32, #tpu.memory_space<smem>>
    %143 = vector.broadcast %142 : f32 to vector<14x32xf32>
    %144 = arith.mulf %143, %129 : vector<14x32xf32>
    %145 = arith.addf %128, %144 : vector<14x32xf32>
    %146 = vector.extract_strided_slice %9 {offsets = [2, 2], sizes = [14, 32], strides = [1, 1]} : vector<16x34xf32> to vector<14x32xf32>
    %c8 = arith.constant 8 : index
    %147 = memref.load %arg1[%c8] : memref<144xf32, #tpu.memory_space<smem>>
    %148 = vector.broadcast %147 : f32 to vector<14x32xf32>
    %149 = arith.mulf %148, %146 : vector<14x32xf32>
    %150 = arith.addf %133, %149 : vector<14x32xf32>
    %c44 = arith.constant 44 : index
    %151 = memref.load %arg1[%c44] : memref<144xf32, #tpu.memory_space<smem>>
    %152 = vector.broadcast %151 : f32 to vector<14x32xf32>
    %153 = arith.mulf %152, %146 : vector<14x32xf32>
    %154 = arith.addf %137, %153 : vector<14x32xf32>
    %c80 = arith.constant 80 : index
    %155 = memref.load %arg1[%c80] : memref<144xf32, #tpu.memory_space<smem>>
    %156 = vector.broadcast %155 : f32 to vector<14x32xf32>
    %157 = arith.mulf %156, %146 : vector<14x32xf32>
    %158 = arith.addf %141, %157 : vector<14x32xf32>
    %c116 = arith.constant 116 : index
    %159 = memref.load %arg1[%c116] : memref<144xf32, #tpu.memory_space<smem>>
    %160 = vector.broadcast %159 : f32 to vector<14x32xf32>
    %161 = arith.mulf %160, %146 : vector<14x32xf32>
    %162 = arith.addf %145, %161 : vector<14x32xf32>
    %c0_8 = arith.constant 0 : index
    %c1_9 = arith.constant 1 : index
    %c0_10 = arith.constant 0 : index
    %c0_11 = arith.constant 0 : index
    %163 = vector.load %arg3[%c0_8, %c1_9, %c0_10, %c0_11] : memref<1x4x16x34xf32, #tpu.memory_space<vmem>>, vector<1x1x16x34xf32>
    %164 = vector.shape_cast %163 : vector<1x1x16x34xf32> to vector<16x34xf32>
    %165 = vector.extract_strided_slice %164 {offsets = [0, 0], sizes = [14, 32], strides = [1, 1]} : vector<16x34xf32> to vector<14x32xf32>
    %c9 = arith.constant 9 : index
    %166 = memref.load %arg1[%c9] : memref<144xf32, #tpu.memory_space<smem>>
    %167 = vector.broadcast %166 : f32 to vector<14x32xf32>
    %168 = arith.mulf %167, %165 : vector<14x32xf32>
    %169 = arith.addf %150, %168 : vector<14x32xf32>
    %c45 = arith.constant 45 : index
    %170 = memref.load %arg1[%c45] : memref<144xf32, #tpu.memory_space<smem>>
    %171 = vector.broadcast %170 : f32 to vector<14x32xf32>
    %172 = arith.mulf %171, %165 : vector<14x32xf32>
    %173 = arith.addf %154, %172 : vector<14x32xf32>
    %c81 = arith.constant 81 : index
    %174 = memref.load %arg1[%c81] : memref<144xf32, #tpu.memory_space<smem>>
    %175 = vector.broadcast %174 : f32 to vector<14x32xf32>
    %176 = arith.mulf %175, %165 : vector<14x32xf32>
    %177 = arith.addf %158, %176 : vector<14x32xf32>
    %c117 = arith.constant 117 : index
    %178 = memref.load %arg1[%c117] : memref<144xf32, #tpu.memory_space<smem>>
    %179 = vector.broadcast %178 : f32 to vector<14x32xf32>
    %180 = arith.mulf %179, %165 : vector<14x32xf32>
    %181 = arith.addf %162, %180 : vector<14x32xf32>
    %182 = vector.extract_strided_slice %164 {offsets = [0, 1], sizes = [14, 32], strides = [1, 1]} : vector<16x34xf32> to vector<14x32xf32>
    %c10 = arith.constant 10 : index
    %183 = memref.load %arg1[%c10] : memref<144xf32, #tpu.memory_space<smem>>
    %184 = vector.broadcast %183 : f32 to vector<14x32xf32>
    %185 = arith.mulf %184, %182 : vector<14x32xf32>
    %186 = arith.addf %169, %185 : vector<14x32xf32>
    %c46 = arith.constant 46 : index
    %187 = memref.load %arg1[%c46] : memref<144xf32, #tpu.memory_space<smem>>
    %188 = vector.broadcast %187 : f32 to vector<14x32xf32>
    %189 = arith.mulf %188, %182 : vector<14x32xf32>
    %190 = arith.addf %173, %189 : vector<14x32xf32>
    %c82 = arith.constant 82 : index
    %191 = memref.load %arg1[%c82] : memref<144xf32, #tpu.memory_space<smem>>
    %192 = vector.broadcast %191 : f32 to vector<14x32xf32>
    %193 = arith.mulf %192, %182 : vector<14x32xf32>
    %194 = arith.addf %177, %193 : vector<14x32xf32>
    %c118 = arith.constant 118 : index
    %195 = memref.load %arg1[%c118] : memref<144xf32, #tpu.memory_space<smem>>
    %196 = vector.broadcast %195 : f32 to vector<14x32xf32>
    %197 = arith.mulf %196, %182 : vector<14x32xf32>
    %198 = arith.addf %181, %197 : vector<14x32xf32>
    %199 = vector.extract_strided_slice %164 {offsets = [0, 2], sizes = [14, 32], strides = [1, 1]} : vector<16x34xf32> to vector<14x32xf32>
    %c11 = arith.constant 11 : index
    %200 = memref.load %arg1[%c11] : memref<144xf32, #tpu.memory_space<smem>>
    %201 = vector.broadcast %200 : f32 to vector<14x32xf32>
    %202 = arith.mulf %201, %199 : vector<14x32xf32>
    %203 = arith.addf %186, %202 : vector<14x32xf32>
    %c47 = arith.constant 47 : index
    %204 = memref.load %arg1[%c47] : memref<144xf32, #tpu.memory_space<smem>>
    %205 = vector.broadcast %204 : f32 to vector<14x32xf32>
    %206 = arith.mulf %205, %199 : vector<14x32xf32>
    %207 = arith.addf %190, %206 : vector<14x32xf32>
    %c83 = arith.constant 83 : index
    %208 = memref.load %arg1[%c83] : memref<144xf32, #tpu.memory_space<smem>>
    %209 = vector.broadcast %208 : f32 to vector<14x32xf32>
    %210 = arith.mulf %209, %199 : vector<14x32xf32>
    %211 = arith.addf %194, %210 : vector<14x32xf32>
    %c119 = arith.constant 119 : index
    %212 = memref.load %arg1[%c119] : memref<144xf32, #tpu.memory_space<smem>>
    %213 = vector.broadcast %212 : f32 to vector<14x32xf32>
    %214 = arith.mulf %213, %199 : vector<14x32xf32>
    %215 = arith.addf %198, %214 : vector<14x32xf32>
    %216 = vector.extract_strided_slice %164 {offsets = [1, 0], sizes = [14, 32], strides = [1, 1]} : vector<16x34xf32> to vector<14x32xf32>
    %c12 = arith.constant 12 : index
    %217 = memref.load %arg1[%c12] : memref<144xf32, #tpu.memory_space<smem>>
    %218 = vector.broadcast %217 : f32 to vector<14x32xf32>
    %219 = arith.mulf %218, %216 : vector<14x32xf32>
    %220 = arith.addf %203, %219 : vector<14x32xf32>
    %c48 = arith.constant 48 : index
    %221 = memref.load %arg1[%c48] : memref<144xf32, #tpu.memory_space<smem>>
    %222 = vector.broadcast %221 : f32 to vector<14x32xf32>
    %223 = arith.mulf %222, %216 : vector<14x32xf32>
    %224 = arith.addf %207, %223 : vector<14x32xf32>
    %c84 = arith.constant 84 : index
    %225 = memref.load %arg1[%c84] : memref<144xf32, #tpu.memory_space<smem>>
    %226 = vector.broadcast %225 : f32 to vector<14x32xf32>
    %227 = arith.mulf %226, %216 : vector<14x32xf32>
    %228 = arith.addf %211, %227 : vector<14x32xf32>
    %c120 = arith.constant 120 : index
    %229 = memref.load %arg1[%c120] : memref<144xf32, #tpu.memory_space<smem>>
    %230 = vector.broadcast %229 : f32 to vector<14x32xf32>
    %231 = arith.mulf %230, %216 : vector<14x32xf32>
    %232 = arith.addf %215, %231 : vector<14x32xf32>
    %233 = vector.extract_strided_slice %164 {offsets = [1, 1], sizes = [14, 32], strides = [1, 1]} : vector<16x34xf32> to vector<14x32xf32>
    %c13 = arith.constant 13 : index
    %234 = memref.load %arg1[%c13] : memref<144xf32, #tpu.memory_space<smem>>
    %235 = vector.broadcast %234 : f32 to vector<14x32xf32>
    %236 = arith.mulf %235, %233 : vector<14x32xf32>
    %237 = arith.addf %220, %236 : vector<14x32xf32>
    %c49 = arith.constant 49 : index
    %238 = memref.load %arg1[%c49] : memref<144xf32, #tpu.memory_space<smem>>
    %239 = vector.broadcast %238 : f32 to vector<14x32xf32>
    %240 = arith.mulf %239, %233 : vector<14x32xf32>
    %241 = arith.addf %224, %240 : vector<14x32xf32>
    %c85 = arith.constant 85 : index
    %242 = memref.load %arg1[%c85] : memref<144xf32, #tpu.memory_space<smem>>
    %243 = vector.broadcast %242 : f32 to vector<14x32xf32>
    %244 = arith.mulf %243, %233 : vector<14x32xf32>
    %245 = arith.addf %228, %244 : vector<14x32xf32>
    %c121 = arith.constant 121 : index
    %246 = memref.load %arg1[%c121] : memref<144xf32, #tpu.memory_space<smem>>
    %247 = vector.broadcast %246 : f32 to vector<14x32xf32>
    %248 = arith.mulf %247, %233 : vector<14x32xf32>
    %249 = arith.addf %232, %248 : vector<14x32xf32>
    %250 = vector.extract_strided_slice %164 {offsets = [1, 2], sizes = [14, 32], strides = [1, 1]} : vector<16x34xf32> to vector<14x32xf32>
    %c14 = arith.constant 14 : index
    %251 = memref.load %arg1[%c14] : memref<144xf32, #tpu.memory_space<smem>>
    %252 = vector.broadcast %251 : f32 to vector<14x32xf32>
    %253 = arith.mulf %252, %250 : vector<14x32xf32>
    %254 = arith.addf %237, %253 : vector<14x32xf32>
    %c50 = arith.constant 50 : index
    %255 = memref.load %arg1[%c50] : memref<144xf32, #tpu.memory_space<smem>>
    %256 = vector.broadcast %255 : f32 to vector<14x32xf32>
    %257 = arith.mulf %256, %250 : vector<14x32xf32>
    %258 = arith.addf %241, %257 : vector<14x32xf32>
    %c86 = arith.constant 86 : index
    %259 = memref.load %arg1[%c86] : memref<144xf32, #tpu.memory_space<smem>>
    %260 = vector.broadcast %259 : f32 to vector<14x32xf32>
    %261 = arith.mulf %260, %250 : vector<14x32xf32>
    %262 = arith.addf %245, %261 : vector<14x32xf32>
    %c122 = arith.constant 122 : index
    %263 = memref.load %arg1[%c122] : memref<144xf32, #tpu.memory_space<smem>>
    %264 = vector.broadcast %263 : f32 to vector<14x32xf32>
    %265 = arith.mulf %264, %250 : vector<14x32xf32>
    %266 = arith.addf %249, %265 : vector<14x32xf32>
    %267 = vector.extract_strided_slice %164 {offsets = [2, 0], sizes = [14, 32], strides = [1, 1]} : vector<16x34xf32> to vector<14x32xf32>
    %c15 = arith.constant 15 : index
    %268 = memref.load %arg1[%c15] : memref<144xf32, #tpu.memory_space<smem>>
    %269 = vector.broadcast %268 : f32 to vector<14x32xf32>
    %270 = arith.mulf %269, %267 : vector<14x32xf32>
    %271 = arith.addf %254, %270 : vector<14x32xf32>
    %c51 = arith.constant 51 : index
    %272 = memref.load %arg1[%c51] : memref<144xf32, #tpu.memory_space<smem>>
    %273 = vector.broadcast %272 : f32 to vector<14x32xf32>
    %274 = arith.mulf %273, %267 : vector<14x32xf32>
    %275 = arith.addf %258, %274 : vector<14x32xf32>
    %c87 = arith.constant 87 : index
    %276 = memref.load %arg1[%c87] : memref<144xf32, #tpu.memory_space<smem>>
    %277 = vector.broadcast %276 : f32 to vector<14x32xf32>
    %278 = arith.mulf %277, %267 : vector<14x32xf32>
    %279 = arith.addf %262, %278 : vector<14x32xf32>
    %c123 = arith.constant 123 : index
    %280 = memref.load %arg1[%c123] : memref<144xf32, #tpu.memory_space<smem>>
    %281 = vector.broadcast %280 : f32 to vector<14x32xf32>
    %282 = arith.mulf %281, %267 : vector<14x32xf32>
    %283 = arith.addf %266, %282 : vector<14x32xf32>
    %284 = vector.extract_strided_slice %164 {offsets = [2, 1], sizes = [14, 32], strides = [1, 1]} : vector<16x34xf32> to vector<14x32xf32>
    %c16 = arith.constant 16 : index
    %285 = memref.load %arg1[%c16] : memref<144xf32, #tpu.memory_space<smem>>
    %286 = vector.broadcast %285 : f32 to vector<14x32xf32>
    %287 = arith.mulf %286, %284 : vector<14x32xf32>
    %288 = arith.addf %271, %287 : vector<14x32xf32>
    %c52 = arith.constant 52 : index
    %289 = memref.load %arg1[%c52] : memref<144xf32, #tpu.memory_space<smem>>
    %290 = vector.broadcast %289 : f32 to vector<14x32xf32>
    %291 = arith.mulf %290, %284 : vector<14x32xf32>
    %292 = arith.addf %275, %291 : vector<14x32xf32>
    %c88 = arith.constant 88 : index
    %293 = memref.load %arg1[%c88] : memref<144xf32, #tpu.memory_space<smem>>
    %294 = vector.broadcast %293 : f32 to vector<14x32xf32>
    %295 = arith.mulf %294, %284 : vector<14x32xf32>
    %296 = arith.addf %279, %295 : vector<14x32xf32>
    %c124 = arith.constant 124 : index
    %297 = memref.load %arg1[%c124] : memref<144xf32, #tpu.memory_space<smem>>
    %298 = vector.broadcast %297 : f32 to vector<14x32xf32>
    %299 = arith.mulf %298, %284 : vector<14x32xf32>
    %300 = arith.addf %283, %299 : vector<14x32xf32>
    %301 = vector.extract_strided_slice %164 {offsets = [2, 2], sizes = [14, 32], strides = [1, 1]} : vector<16x34xf32> to vector<14x32xf32>
    %c17 = arith.constant 17 : index
    %302 = memref.load %arg1[%c17] : memref<144xf32, #tpu.memory_space<smem>>
    %303 = vector.broadcast %302 : f32 to vector<14x32xf32>
    %304 = arith.mulf %303, %301 : vector<14x32xf32>
    %305 = arith.addf %288, %304 : vector<14x32xf32>
    %c53 = arith.constant 53 : index
    %306 = memref.load %arg1[%c53] : memref<144xf32, #tpu.memory_space<smem>>
    %307 = vector.broadcast %306 : f32 to vector<14x32xf32>
    %308 = arith.mulf %307, %301 : vector<14x32xf32>
    %309 = arith.addf %292, %308 : vector<14x32xf32>
    %c89 = arith.constant 89 : index
    %310 = memref.load %arg1[%c89] : memref<144xf32, #tpu.memory_space<smem>>
    %311 = vector.broadcast %310 : f32 to vector<14x32xf32>
    %312 = arith.mulf %311, %301 : vector<14x32xf32>
    %313 = arith.addf %296, %312 : vector<14x32xf32>
    %c125 = arith.constant 125 : index
    %314 = memref.load %arg1[%c125] : memref<144xf32, #tpu.memory_space<smem>>
    %315 = vector.broadcast %314 : f32 to vector<14x32xf32>
    %316 = arith.mulf %315, %301 : vector<14x32xf32>
    %317 = arith.addf %300, %316 : vector<14x32xf32>
    %c0_12 = arith.constant 0 : index
    %c2_13 = arith.constant 2 : index
    %c0_14 = arith.constant 0 : index
    %c0_15 = arith.constant 0 : index
    %318 = vector.load %arg3[%c0_12, %c2_13, %c0_14, %c0_15] : memref<1x4x16x34xf32, #tpu.memory_space<vmem>>, vector<1x1x16x34xf32>
    %319 = vector.shape_cast %318 : vector<1x1x16x34xf32> to vector<16x34xf32>
    %320 = vector.extract_strided_slice %319 {offsets = [0, 0], sizes = [14, 32], strides = [1, 1]} : vector<16x34xf32> to vector<14x32xf32>
    %c18 = arith.constant 18 : index
    %321 = memref.load %arg1[%c18] : memref<144xf32, #tpu.memory_space<smem>>
    %322 = vector.broadcast %321 : f32 to vector<14x32xf32>
    %323 = arith.mulf %322, %320 : vector<14x32xf32>
    %324 = arith.addf %305, %323 : vector<14x32xf32>
    %c54 = arith.constant 54 : index
    %325 = memref.load %arg1[%c54] : memref<144xf32, #tpu.memory_space<smem>>
    %326 = vector.broadcast %325 : f32 to vector<14x32xf32>
    %327 = arith.mulf %326, %320 : vector<14x32xf32>
    %328 = arith.addf %309, %327 : vector<14x32xf32>
    %c90 = arith.constant 90 : index
    %329 = memref.load %arg1[%c90] : memref<144xf32, #tpu.memory_space<smem>>
    %330 = vector.broadcast %329 : f32 to vector<14x32xf32>
    %331 = arith.mulf %330, %320 : vector<14x32xf32>
    %332 = arith.addf %313, %331 : vector<14x32xf32>
    %c126 = arith.constant 126 : index
    %333 = memref.load %arg1[%c126] : memref<144xf32, #tpu.memory_space<smem>>
    %334 = vector.broadcast %333 : f32 to vector<14x32xf32>
    %335 = arith.mulf %334, %320 : vector<14x32xf32>
    %336 = arith.addf %317, %335 : vector<14x32xf32>
    %337 = vector.extract_strided_slice %319 {offsets = [0, 1], sizes = [14, 32], strides = [1, 1]} : vector<16x34xf32> to vector<14x32xf32>
    %c19 = arith.constant 19 : index
    %338 = memref.load %arg1[%c19] : memref<144xf32, #tpu.memory_space<smem>>
    %339 = vector.broadcast %338 : f32 to vector<14x32xf32>
    %340 = arith.mulf %339, %337 : vector<14x32xf32>
    %341 = arith.addf %324, %340 : vector<14x32xf32>
    %c55 = arith.constant 55 : index
    %342 = memref.load %arg1[%c55] : memref<144xf32, #tpu.memory_space<smem>>
    %343 = vector.broadcast %342 : f32 to vector<14x32xf32>
    %344 = arith.mulf %343, %337 : vector<14x32xf32>
    %345 = arith.addf %328, %344 : vector<14x32xf32>
    %c91 = arith.constant 91 : index
    %346 = memref.load %arg1[%c91] : memref<144xf32, #tpu.memory_space<smem>>
    %347 = vector.broadcast %346 : f32 to vector<14x32xf32>
    %348 = arith.mulf %347, %337 : vector<14x32xf32>
    %349 = arith.addf %332, %348 : vector<14x32xf32>
    %c127 = arith.constant 127 : index
    %350 = memref.load %arg1[%c127] : memref<144xf32, #tpu.memory_space<smem>>
    %351 = vector.broadcast %350 : f32 to vector<14x32xf32>
    %352 = arith.mulf %351, %337 : vector<14x32xf32>
    %353 = arith.addf %336, %352 : vector<14x32xf32>
    %354 = vector.extract_strided_slice %319 {offsets = [0, 2], sizes = [14, 32], strides = [1, 1]} : vector<16x34xf32> to vector<14x32xf32>
    %c20 = arith.constant 20 : index
    %355 = memref.load %arg1[%c20] : memref<144xf32, #tpu.memory_space<smem>>
    %356 = vector.broadcast %355 : f32 to vector<14x32xf32>
    %357 = arith.mulf %356, %354 : vector<14x32xf32>
    %358 = arith.addf %341, %357 : vector<14x32xf32>
    %c56 = arith.constant 56 : index
    %359 = memref.load %arg1[%c56] : memref<144xf32, #tpu.memory_space<smem>>
    %360 = vector.broadcast %359 : f32 to vector<14x32xf32>
    %361 = arith.mulf %360, %354 : vector<14x32xf32>
    %362 = arith.addf %345, %361 : vector<14x32xf32>
    %c92 = arith.constant 92 : index
    %363 = memref.load %arg1[%c92] : memref<144xf32, #tpu.memory_space<smem>>
    %364 = vector.broadcast %363 : f32 to vector<14x32xf32>
    %365 = arith.mulf %364, %354 : vector<14x32xf32>
    %366 = arith.addf %349, %365 : vector<14x32xf32>
    %c128 = arith.constant 128 : index
    %367 = memref.load %arg1[%c128] : memref<144xf32, #tpu.memory_space<smem>>
    %368 = vector.broadcast %367 : f32 to vector<14x32xf32>
    %369 = arith.mulf %368, %354 : vector<14x32xf32>
    %370 = arith.addf %353, %369 : vector<14x32xf32>
    %371 = vector.extract_strided_slice %319 {offsets = [1, 0], sizes = [14, 32], strides = [1, 1]} : vector<16x34xf32> to vector<14x32xf32>
    %c21 = arith.constant 21 : index
    %372 = memref.load %arg1[%c21] : memref<144xf32, #tpu.memory_space<smem>>
    %373 = vector.broadcast %372 : f32 to vector<14x32xf32>
    %374 = arith.mulf %373, %371 : vector<14x32xf32>
    %375 = arith.addf %358, %374 : vector<14x32xf32>
    %c57 = arith.constant 57 : index
    %376 = memref.load %arg1[%c57] : memref<144xf32, #tpu.memory_space<smem>>
    %377 = vector.broadcast %376 : f32 to vector<14x32xf32>
    %378 = arith.mulf %377, %371 : vector<14x32xf32>
    %379 = arith.addf %362, %378 : vector<14x32xf32>
    %c93 = arith.constant 93 : index
    %380 = memref.load %arg1[%c93] : memref<144xf32, #tpu.memory_space<smem>>
    %381 = vector.broadcast %380 : f32 to vector<14x32xf32>
    %382 = arith.mulf %381, %371 : vector<14x32xf32>
    %383 = arith.addf %366, %382 : vector<14x32xf32>
    %c129 = arith.constant 129 : index
    %384 = memref.load %arg1[%c129] : memref<144xf32, #tpu.memory_space<smem>>
    %385 = vector.broadcast %384 : f32 to vector<14x32xf32>
    %386 = arith.mulf %385, %371 : vector<14x32xf32>
    %387 = arith.addf %370, %386 : vector<14x32xf32>
    %388 = vector.extract_strided_slice %319 {offsets = [1, 1], sizes = [14, 32], strides = [1, 1]} : vector<16x34xf32> to vector<14x32xf32>
    %c22 = arith.constant 22 : index
    %389 = memref.load %arg1[%c22] : memref<144xf32, #tpu.memory_space<smem>>
    %390 = vector.broadcast %389 : f32 to vector<14x32xf32>
    %391 = arith.mulf %390, %388 : vector<14x32xf32>
    %392 = arith.addf %375, %391 : vector<14x32xf32>
    %c58 = arith.constant 58 : index
    %393 = memref.load %arg1[%c58] : memref<144xf32, #tpu.memory_space<smem>>
    %394 = vector.broadcast %393 : f32 to vector<14x32xf32>
    %395 = arith.mulf %394, %388 : vector<14x32xf32>
    %396 = arith.addf %379, %395 : vector<14x32xf32>
    %c94 = arith.constant 94 : index
    %397 = memref.load %arg1[%c94] : memref<144xf32, #tpu.memory_space<smem>>
    %398 = vector.broadcast %397 : f32 to vector<14x32xf32>
    %399 = arith.mulf %398, %388 : vector<14x32xf32>
    %400 = arith.addf %383, %399 : vector<14x32xf32>
    %c130 = arith.constant 130 : index
    %401 = memref.load %arg1[%c130] : memref<144xf32, #tpu.memory_space<smem>>
    %402 = vector.broadcast %401 : f32 to vector<14x32xf32>
    %403 = arith.mulf %402, %388 : vector<14x32xf32>
    %404 = arith.addf %387, %403 : vector<14x32xf32>
    %405 = vector.extract_strided_slice %319 {offsets = [1, 2], sizes = [14, 32], strides = [1, 1]} : vector<16x34xf32> to vector<14x32xf32>
    %c23 = arith.constant 23 : index
    %406 = memref.load %arg1[%c23] : memref<144xf32, #tpu.memory_space<smem>>
    %407 = vector.broadcast %406 : f32 to vector<14x32xf32>
    %408 = arith.mulf %407, %405 : vector<14x32xf32>
    %409 = arith.addf %392, %408 : vector<14x32xf32>
    %c59 = arith.constant 59 : index
    %410 = memref.load %arg1[%c59] : memref<144xf32, #tpu.memory_space<smem>>
    %411 = vector.broadcast %410 : f32 to vector<14x32xf32>
    %412 = arith.mulf %411, %405 : vector<14x32xf32>
    %413 = arith.addf %396, %412 : vector<14x32xf32>
    %c95 = arith.constant 95 : index
    %414 = memref.load %arg1[%c95] : memref<144xf32, #tpu.memory_space<smem>>
    %415 = vector.broadcast %414 : f32 to vector<14x32xf32>
    %416 = arith.mulf %415, %405 : vector<14x32xf32>
    %417 = arith.addf %400, %416 : vector<14x32xf32>
    %c131 = arith.constant 131 : index
    %418 = memref.load %arg1[%c131] : memref<144xf32, #tpu.memory_space<smem>>
    %419 = vector.broadcast %418 : f32 to vector<14x32xf32>
    %420 = arith.mulf %419, %405 : vector<14x32xf32>
    %421 = arith.addf %404, %420 : vector<14x32xf32>
    %422 = vector.extract_strided_slice %319 {offsets = [2, 0], sizes = [14, 32], strides = [1, 1]} : vector<16x34xf32> to vector<14x32xf32>
    %c24 = arith.constant 24 : index
    %423 = memref.load %arg1[%c24] : memref<144xf32, #tpu.memory_space<smem>>
    %424 = vector.broadcast %423 : f32 to vector<14x32xf32>
    %425 = arith.mulf %424, %422 : vector<14x32xf32>
    %426 = arith.addf %409, %425 : vector<14x32xf32>
    %c60 = arith.constant 60 : index
    %427 = memref.load %arg1[%c60] : memref<144xf32, #tpu.memory_space<smem>>
    %428 = vector.broadcast %427 : f32 to vector<14x32xf32>
    %429 = arith.mulf %428, %422 : vector<14x32xf32>
    %430 = arith.addf %413, %429 : vector<14x32xf32>
    %c96 = arith.constant 96 : index
    %431 = memref.load %arg1[%c96] : memref<144xf32, #tpu.memory_space<smem>>
    %432 = vector.broadcast %431 : f32 to vector<14x32xf32>
    %433 = arith.mulf %432, %422 : vector<14x32xf32>
    %434 = arith.addf %417, %433 : vector<14x32xf32>
    %c132 = arith.constant 132 : index
    %435 = memref.load %arg1[%c132] : memref<144xf32, #tpu.memory_space<smem>>
    %436 = vector.broadcast %435 : f32 to vector<14x32xf32>
    %437 = arith.mulf %436, %422 : vector<14x32xf32>
    %438 = arith.addf %421, %437 : vector<14x32xf32>
    %439 = vector.extract_strided_slice %319 {offsets = [2, 1], sizes = [14, 32], strides = [1, 1]} : vector<16x34xf32> to vector<14x32xf32>
    %c25 = arith.constant 25 : index
    %440 = memref.load %arg1[%c25] : memref<144xf32, #tpu.memory_space<smem>>
    %441 = vector.broadcast %440 : f32 to vector<14x32xf32>
    %442 = arith.mulf %441, %439 : vector<14x32xf32>
    %443 = arith.addf %426, %442 : vector<14x32xf32>
    %c61 = arith.constant 61 : index
    %444 = memref.load %arg1[%c61] : memref<144xf32, #tpu.memory_space<smem>>
    %445 = vector.broadcast %444 : f32 to vector<14x32xf32>
    %446 = arith.mulf %445, %439 : vector<14x32xf32>
    %447 = arith.addf %430, %446 : vector<14x32xf32>
    %c97 = arith.constant 97 : index
    %448 = memref.load %arg1[%c97] : memref<144xf32, #tpu.memory_space<smem>>
    %449 = vector.broadcast %448 : f32 to vector<14x32xf32>
    %450 = arith.mulf %449, %439 : vector<14x32xf32>
    %451 = arith.addf %434, %450 : vector<14x32xf32>
    %c133 = arith.constant 133 : index
    %452 = memref.load %arg1[%c133] : memref<144xf32, #tpu.memory_space<smem>>
    %453 = vector.broadcast %452 : f32 to vector<14x32xf32>
    %454 = arith.mulf %453, %439 : vector<14x32xf32>
    %455 = arith.addf %438, %454 : vector<14x32xf32>
    %456 = vector.extract_strided_slice %319 {offsets = [2, 2], sizes = [14, 32], strides = [1, 1]} : vector<16x34xf32> to vector<14x32xf32>
    %c26 = arith.constant 26 : index
    %457 = memref.load %arg1[%c26] : memref<144xf32, #tpu.memory_space<smem>>
    %458 = vector.broadcast %457 : f32 to vector<14x32xf32>
    %459 = arith.mulf %458, %456 : vector<14x32xf32>
    %460 = arith.addf %443, %459 : vector<14x32xf32>
    %c62 = arith.constant 62 : index
    %461 = memref.load %arg1[%c62] : memref<144xf32, #tpu.memory_space<smem>>
    %462 = vector.broadcast %461 : f32 to vector<14x32xf32>
    %463 = arith.mulf %462, %456 : vector<14x32xf32>
    %464 = arith.addf %447, %463 : vector<14x32xf32>
    %c98 = arith.constant 98 : index
    %465 = memref.load %arg1[%c98] : memref<144xf32, #tpu.memory_space<smem>>
    %466 = vector.broadcast %465 : f32 to vector<14x32xf32>
    %467 = arith.mulf %466, %456 : vector<14x32xf32>
    %468 = arith.addf %451, %467 : vector<14x32xf32>
    %c134 = arith.constant 134 : index
    %469 = memref.load %arg1[%c134] : memref<144xf32, #tpu.memory_space<smem>>
    %470 = vector.broadcast %469 : f32 to vector<14x32xf32>
    %471 = arith.mulf %470, %456 : vector<14x32xf32>
    %472 = arith.addf %455, %471 : vector<14x32xf32>
    %c0_16 = arith.constant 0 : index
    %c3_17 = arith.constant 3 : index
    %c0_18 = arith.constant 0 : index
    %c0_19 = arith.constant 0 : index
    %473 = vector.load %arg3[%c0_16, %c3_17, %c0_18, %c0_19] : memref<1x4x16x34xf32, #tpu.memory_space<vmem>>, vector<1x1x16x34xf32>
    %474 = vector.shape_cast %473 : vector<1x1x16x34xf32> to vector<16x34xf32>
    %475 = vector.extract_strided_slice %474 {offsets = [0, 0], sizes = [14, 32], strides = [1, 1]} : vector<16x34xf32> to vector<14x32xf32>
    %c27 = arith.constant 27 : index
    %476 = memref.load %arg1[%c27] : memref<144xf32, #tpu.memory_space<smem>>
    %477 = vector.broadcast %476 : f32 to vector<14x32xf32>
    %478 = arith.mulf %477, %475 : vector<14x32xf32>
    %479 = arith.addf %460, %478 : vector<14x32xf32>
    %c63 = arith.constant 63 : index
    %480 = memref.load %arg1[%c63] : memref<144xf32, #tpu.memory_space<smem>>
    %481 = vector.broadcast %480 : f32 to vector<14x32xf32>
    %482 = arith.mulf %481, %475 : vector<14x32xf32>
    %483 = arith.addf %464, %482 : vector<14x32xf32>
    %c99 = arith.constant 99 : index
    %484 = memref.load %arg1[%c99] : memref<144xf32, #tpu.memory_space<smem>>
    %485 = vector.broadcast %484 : f32 to vector<14x32xf32>
    %486 = arith.mulf %485, %475 : vector<14x32xf32>
    %487 = arith.addf %468, %486 : vector<14x32xf32>
    %c135 = arith.constant 135 : index
    %488 = memref.load %arg1[%c135] : memref<144xf32, #tpu.memory_space<smem>>
    %489 = vector.broadcast %488 : f32 to vector<14x32xf32>
    %490 = arith.mulf %489, %475 : vector<14x32xf32>
    %491 = arith.addf %472, %490 : vector<14x32xf32>
    %492 = vector.extract_strided_slice %474 {offsets = [0, 1], sizes = [14, 32], strides = [1, 1]} : vector<16x34xf32> to vector<14x32xf32>
    %c28 = arith.constant 28 : index
    %493 = memref.load %arg1[%c28] : memref<144xf32, #tpu.memory_space<smem>>
    %494 = vector.broadcast %493 : f32 to vector<14x32xf32>
    %495 = arith.mulf %494, %492 : vector<14x32xf32>
    %496 = arith.addf %479, %495 : vector<14x32xf32>
    %c64 = arith.constant 64 : index
    %497 = memref.load %arg1[%c64] : memref<144xf32, #tpu.memory_space<smem>>
    %498 = vector.broadcast %497 : f32 to vector<14x32xf32>
    %499 = arith.mulf %498, %492 : vector<14x32xf32>
    %500 = arith.addf %483, %499 : vector<14x32xf32>
    %c100 = arith.constant 100 : index
    %501 = memref.load %arg1[%c100] : memref<144xf32, #tpu.memory_space<smem>>
    %502 = vector.broadcast %501 : f32 to vector<14x32xf32>
    %503 = arith.mulf %502, %492 : vector<14x32xf32>
    %504 = arith.addf %487, %503 : vector<14x32xf32>
    %c136 = arith.constant 136 : index
    %505 = memref.load %arg1[%c136] : memref<144xf32, #tpu.memory_space<smem>>
    %506 = vector.broadcast %505 : f32 to vector<14x32xf32>
    %507 = arith.mulf %506, %492 : vector<14x32xf32>
    %508 = arith.addf %491, %507 : vector<14x32xf32>
    %509 = vector.extract_strided_slice %474 {offsets = [0, 2], sizes = [14, 32], strides = [1, 1]} : vector<16x34xf32> to vector<14x32xf32>
    %c29 = arith.constant 29 : index
    %510 = memref.load %arg1[%c29] : memref<144xf32, #tpu.memory_space<smem>>
    %511 = vector.broadcast %510 : f32 to vector<14x32xf32>
    %512 = arith.mulf %511, %509 : vector<14x32xf32>
    %513 = arith.addf %496, %512 : vector<14x32xf32>
    %c65 = arith.constant 65 : index
    %514 = memref.load %arg1[%c65] : memref<144xf32, #tpu.memory_space<smem>>
    %515 = vector.broadcast %514 : f32 to vector<14x32xf32>
    %516 = arith.mulf %515, %509 : vector<14x32xf32>
    %517 = arith.addf %500, %516 : vector<14x32xf32>
    %c101 = arith.constant 101 : index
    %518 = memref.load %arg1[%c101] : memref<144xf32, #tpu.memory_space<smem>>
    %519 = vector.broadcast %518 : f32 to vector<14x32xf32>
    %520 = arith.mulf %519, %509 : vector<14x32xf32>
    %521 = arith.addf %504, %520 : vector<14x32xf32>
    %c137 = arith.constant 137 : index
    %522 = memref.load %arg1[%c137] : memref<144xf32, #tpu.memory_space<smem>>
    %523 = vector.broadcast %522 : f32 to vector<14x32xf32>
    %524 = arith.mulf %523, %509 : vector<14x32xf32>
    %525 = arith.addf %508, %524 : vector<14x32xf32>
    %526 = vector.extract_strided_slice %474 {offsets = [1, 0], sizes = [14, 32], strides = [1, 1]} : vector<16x34xf32> to vector<14x32xf32>
    %c30 = arith.constant 30 : index
    %527 = memref.load %arg1[%c30] : memref<144xf32, #tpu.memory_space<smem>>
    %528 = vector.broadcast %527 : f32 to vector<14x32xf32>
    %529 = arith.mulf %528, %526 : vector<14x32xf32>
    %530 = arith.addf %513, %529 : vector<14x32xf32>
    %c66 = arith.constant 66 : index
    %531 = memref.load %arg1[%c66] : memref<144xf32, #tpu.memory_space<smem>>
    %532 = vector.broadcast %531 : f32 to vector<14x32xf32>
    %533 = arith.mulf %532, %526 : vector<14x32xf32>
    %534 = arith.addf %517, %533 : vector<14x32xf32>
    %c102 = arith.constant 102 : index
    %535 = memref.load %arg1[%c102] : memref<144xf32, #tpu.memory_space<smem>>
    %536 = vector.broadcast %535 : f32 to vector<14x32xf32>
    %537 = arith.mulf %536, %526 : vector<14x32xf32>
    %538 = arith.addf %521, %537 : vector<14x32xf32>
    %c138 = arith.constant 138 : index
    %539 = memref.load %arg1[%c138] : memref<144xf32, #tpu.memory_space<smem>>
    %540 = vector.broadcast %539 : f32 to vector<14x32xf32>
    %541 = arith.mulf %540, %526 : vector<14x32xf32>
    %542 = arith.addf %525, %541 : vector<14x32xf32>
    %543 = vector.extract_strided_slice %474 {offsets = [1, 1], sizes = [14, 32], strides = [1, 1]} : vector<16x34xf32> to vector<14x32xf32>
    %c31 = arith.constant 31 : index
    %544 = memref.load %arg1[%c31] : memref<144xf32, #tpu.memory_space<smem>>
    %545 = vector.broadcast %544 : f32 to vector<14x32xf32>
    %546 = arith.mulf %545, %543 : vector<14x32xf32>
    %547 = arith.addf %530, %546 : vector<14x32xf32>
    %c67 = arith.constant 67 : index
    %548 = memref.load %arg1[%c67] : memref<144xf32, #tpu.memory_space<smem>>
    %549 = vector.broadcast %548 : f32 to vector<14x32xf32>
    %550 = arith.mulf %549, %543 : vector<14x32xf32>
    %551 = arith.addf %534, %550 : vector<14x32xf32>
    %c103 = arith.constant 103 : index
    %552 = memref.load %arg1[%c103] : memref<144xf32, #tpu.memory_space<smem>>
    %553 = vector.broadcast %552 : f32 to vector<14x32xf32>
    %554 = arith.mulf %553, %543 : vector<14x32xf32>
    %555 = arith.addf %538, %554 : vector<14x32xf32>
    %c139 = arith.constant 139 : index
    %556 = memref.load %arg1[%c139] : memref<144xf32, #tpu.memory_space<smem>>
    %557 = vector.broadcast %556 : f32 to vector<14x32xf32>
    %558 = arith.mulf %557, %543 : vector<14x32xf32>
    %559 = arith.addf %542, %558 : vector<14x32xf32>
    %560 = vector.extract_strided_slice %474 {offsets = [1, 2], sizes = [14, 32], strides = [1, 1]} : vector<16x34xf32> to vector<14x32xf32>
    %c32 = arith.constant 32 : index
    %561 = memref.load %arg1[%c32] : memref<144xf32, #tpu.memory_space<smem>>
    %562 = vector.broadcast %561 : f32 to vector<14x32xf32>
    %563 = arith.mulf %562, %560 : vector<14x32xf32>
    %564 = arith.addf %547, %563 : vector<14x32xf32>
    %c68 = arith.constant 68 : index
    %565 = memref.load %arg1[%c68] : memref<144xf32, #tpu.memory_space<smem>>
    %566 = vector.broadcast %565 : f32 to vector<14x32xf32>
    %567 = arith.mulf %566, %560 : vector<14x32xf32>
    %568 = arith.addf %551, %567 : vector<14x32xf32>
    %c104 = arith.constant 104 : index
    %569 = memref.load %arg1[%c104] : memref<144xf32, #tpu.memory_space<smem>>
    %570 = vector.broadcast %569 : f32 to vector<14x32xf32>
    %571 = arith.mulf %570, %560 : vector<14x32xf32>
    %572 = arith.addf %555, %571 : vector<14x32xf32>
    %c140 = arith.constant 140 : index
    %573 = memref.load %arg1[%c140] : memref<144xf32, #tpu.memory_space<smem>>
    %574 = vector.broadcast %573 : f32 to vector<14x32xf32>
    %575 = arith.mulf %574, %560 : vector<14x32xf32>
    %576 = arith.addf %559, %575 : vector<14x32xf32>
    %577 = vector.extract_strided_slice %474 {offsets = [2, 0], sizes = [14, 32], strides = [1, 1]} : vector<16x34xf32> to vector<14x32xf32>
    %c33 = arith.constant 33 : index
    %578 = memref.load %arg1[%c33] : memref<144xf32, #tpu.memory_space<smem>>
    %579 = vector.broadcast %578 : f32 to vector<14x32xf32>
    %580 = arith.mulf %579, %577 : vector<14x32xf32>
    %581 = arith.addf %564, %580 : vector<14x32xf32>
    %c69 = arith.constant 69 : index
    %582 = memref.load %arg1[%c69] : memref<144xf32, #tpu.memory_space<smem>>
    %583 = vector.broadcast %582 : f32 to vector<14x32xf32>
    %584 = arith.mulf %583, %577 : vector<14x32xf32>
    %585 = arith.addf %568, %584 : vector<14x32xf32>
    %c105 = arith.constant 105 : index
    %586 = memref.load %arg1[%c105] : memref<144xf32, #tpu.memory_space<smem>>
    %587 = vector.broadcast %586 : f32 to vector<14x32xf32>
    %588 = arith.mulf %587, %577 : vector<14x32xf32>
    %589 = arith.addf %572, %588 : vector<14x32xf32>
    %c141 = arith.constant 141 : index
    %590 = memref.load %arg1[%c141] : memref<144xf32, #tpu.memory_space<smem>>
    %591 = vector.broadcast %590 : f32 to vector<14x32xf32>
    %592 = arith.mulf %591, %577 : vector<14x32xf32>
    %593 = arith.addf %576, %592 : vector<14x32xf32>
    %594 = vector.extract_strided_slice %474 {offsets = [2, 1], sizes = [14, 32], strides = [1, 1]} : vector<16x34xf32> to vector<14x32xf32>
    %c34 = arith.constant 34 : index
    %595 = memref.load %arg1[%c34] : memref<144xf32, #tpu.memory_space<smem>>
    %596 = vector.broadcast %595 : f32 to vector<14x32xf32>
    %597 = arith.mulf %596, %594 : vector<14x32xf32>
    %598 = arith.addf %581, %597 : vector<14x32xf32>
    %c70 = arith.constant 70 : index
    %599 = memref.load %arg1[%c70] : memref<144xf32, #tpu.memory_space<smem>>
    %600 = vector.broadcast %599 : f32 to vector<14x32xf32>
    %601 = arith.mulf %600, %594 : vector<14x32xf32>
    %602 = arith.addf %585, %601 : vector<14x32xf32>
    %c106 = arith.constant 106 : index
    %603 = memref.load %arg1[%c106] : memref<144xf32, #tpu.memory_space<smem>>
    %604 = vector.broadcast %603 : f32 to vector<14x32xf32>
    %605 = arith.mulf %604, %594 : vector<14x32xf32>
    %606 = arith.addf %589, %605 : vector<14x32xf32>
    %c142 = arith.constant 142 : index
    %607 = memref.load %arg1[%c142] : memref<144xf32, #tpu.memory_space<smem>>
    %608 = vector.broadcast %607 : f32 to vector<14x32xf32>
    %609 = arith.mulf %608, %594 : vector<14x32xf32>
    %610 = arith.addf %593, %609 : vector<14x32xf32>
    %611 = vector.extract_strided_slice %474 {offsets = [2, 2], sizes = [14, 32], strides = [1, 1]} : vector<16x34xf32> to vector<14x32xf32>
    %c35 = arith.constant 35 : index
    %612 = memref.load %arg1[%c35] : memref<144xf32, #tpu.memory_space<smem>>
    %613 = vector.broadcast %612 : f32 to vector<14x32xf32>
    %614 = arith.mulf %613, %611 : vector<14x32xf32>
    %615 = arith.addf %598, %614 : vector<14x32xf32>
    %c71 = arith.constant 71 : index
    %616 = memref.load %arg1[%c71] : memref<144xf32, #tpu.memory_space<smem>>
    %617 = vector.broadcast %616 : f32 to vector<14x32xf32>
    %618 = arith.mulf %617, %611 : vector<14x32xf32>
    %619 = arith.addf %602, %618 : vector<14x32xf32>
    %c107 = arith.constant 107 : index
    %620 = memref.load %arg1[%c107] : memref<144xf32, #tpu.memory_space<smem>>
    %621 = vector.broadcast %620 : f32 to vector<14x32xf32>
    %622 = arith.mulf %621, %611 : vector<14x32xf32>
    %623 = arith.addf %606, %622 : vector<14x32xf32>
    %c143 = arith.constant 143 : index
    %624 = memref.load %arg1[%c143] : memref<144xf32, #tpu.memory_space<smem>>
    %625 = vector.broadcast %624 : f32 to vector<14x32xf32>
    %626 = arith.mulf %625, %611 : vector<14x32xf32>
    %627 = arith.addf %610, %626 : vector<14x32xf32>
    %c0_20 = arith.constant 0 : index
    %c0_21 = arith.constant 0 : index
    %c0_22 = arith.constant 0 : index
    %c0_23 = arith.constant 0 : index
    %628 = vector.load %arg4[%c0_20, %c0_21, %c0_22, %c0_23] : memref<1x4x14x32xf32, #tpu.memory_space<vmem>>, vector<1x1x14x32xf32>
    %629 = vector.shape_cast %628 : vector<1x1x14x32xf32> to vector<14x32xf32>
    %630 = vector.shape_cast %615 : vector<14x32xf32> to vector<1x1x14x32xf32>
    tpu.vector_store %arg4[%c0_20, %c0_21, %c0_22, %c0_23], %630 {strides = array<i32>} : memref<1x4x14x32xf32, #tpu.memory_space<vmem>>, vector<1x1x14x32xf32>,
    %c0_24 = arith.constant 0 : index
    %c1_25 = arith.constant 1 : index
    %c0_26 = arith.constant 0 : index
    %c0_27 = arith.constant 0 : index
    %631 = vector.load %arg4[%c0_24, %c1_25, %c0_26, %c0_27] : memref<1x4x14x32xf32, #tpu.memory_space<vmem>>, vector<1x1x14x32xf32>
    %632 = vector.shape_cast %631 : vector<1x1x14x32xf32> to vector<14x32xf32>
    %633 = vector.shape_cast %619 : vector<14x32xf32> to vector<1x1x14x32xf32>
    tpu.vector_store %arg4[%c0_24, %c1_25, %c0_26, %c0_27], %633 {strides = array<i32>} : memref<1x4x14x32xf32, #tpu.memory_space<vmem>>, vector<1x1x14x32xf32>,
    %c0_28 = arith.constant 0 : index
    %c2_29 = arith.constant 2 : index
    %c0_30 = arith.constant 0 : index
    %c0_31 = arith.constant 0 : index
    %634 = vector.load %arg4[%c0_28, %c2_29, %c0_30, %c0_31] : memref<1x4x14x32xf32, #tpu.memory_space<vmem>>, vector<1x1x14x32xf32>
    %635 = vector.shape_cast %634 : vector<1x1x14x32xf32> to vector<14x32xf32>
    %636 = vector.shape_cast %623 : vector<14x32xf32> to vector<1x1x14x32xf32>
    tpu.vector_store %arg4[%c0_28, %c2_29, %c0_30, %c0_31], %636 {strides = array<i32>} : memref<1x4x14x32xf32, #tpu.memory_space<vmem>>, vector<1x1x14x32xf32>,
    %c0_32 = arith.constant 0 : index
    %c3_33 = arith.constant 3 : index
    %c0_34 = arith.constant 0 : index
    %c0_35 = arith.constant 0 : index
    %637 = vector.load %arg4[%c0_32, %c3_33, %c0_34, %c0_35] : memref<1x4x14x32xf32, #tpu.memory_space<vmem>>, vector<1x1x14x32xf32>
    %638 = vector.shape_cast %637 : vector<1x1x14x32xf32> to vector<14x32xf32>
    %639 = vector.shape_cast %627 : vector<14x32xf32> to vector<1x1x14x32xf32>
    tpu.vector_store %arg4[%c0_32, %c3_33, %c0_34, %c0_35], %639 {strides = array<i32>} : memref<1x4x14x32xf32, #tpu.memory_space<vmem>>, vector<1x1x14x32xf32>,
    return
  }
  func.func @transform_0(%arg0: i32) -> i32 {
    %c0_i32 = arith.constant 0 : i32
    %c0_i32_0 = arith.constant 0 : i32
    return %c0_i32 : i32
  }
  func.func @transform_1(%arg0: i32) -> i32 {
    %c0_i32 = arith.constant 0 : i32
    %c0_i32_0 = arith.constant 0 : i32
    return %c0_i32 : i32
  }
  func.func @transform_2(%arg0: i32) -> (i32, i32, i32, i32) {
    %c0_i32 = arith.constant 0 : i32
    %c0_i32_0 = arith.constant 0 : i32
    %c0_i32_1 = arith.constant 0 : i32
    %c0_i32_2 = arith.constant 0 : i32
    return %arg0, %c0_i32, %c0_i32_0, %c0_i32_1 : i32, i32, i32, i32
  }
  func.func @transform_3(%arg0: i32) -> (i32, i32, i32, i32) {
    %c0_i32 = arith.constant 0 : i32
    %c0_i32_0 = arith.constant 0 : i32
    %c0_i32_1 = arith.constant 0 : i32
    %c0_i32_2 = arith.constant 0 : i32
    return %arg0, %c0_i32, %c0_i32_0, %c0_i32_1 : i32, i32, i32, i32
  }
}

</mosaic_0001>

<llo_original>
// kernel: tpu_custom_call.1
$region0: #{tpu_custom_call.1}
  #allocation0 [shape = 'u32[]', space=smem, size = 0x4, offset = 0x4, fixed_abs, tag = 'smem constant byte address 0x4 - core index']
  #allocation1 [shape = 'u32[144,128]{1,0:T(1,128)}', space=vmem, size = 0x12000, scoped, tag = 'internal scratch']
  %s0 = inlined_call_operand.hbm [shape: f32[144], index: 0, kind: input, shape index: {}]
  %s1 = inlined_call_operand.vmem [shape: f32[4], index: 1, kind: input, shape index: {}]
  %s2 = inlined_call_operand.hbm [shape: f32[1,4,16,34], index: 2, kind: input, shape index: {}]
  %s3 = inlined_call_operand.vmem [shape: f32[1,4,14,32], index: 3, kind: output, shape index: {}]
  %s4 = sld [smem:[#allocation0]]
  $region34: #{tpu_custom_call.1} parent=0
    _
  %s6 = ssub.s32 1, %s4
  %s7 = scalar_select 0, %s6, %s4
  $region1: #{tpu_custom_call.1} parent=0
    #allocation2 [shape = 'u8[1024]{0}', space=smem, size = 0x400, scoped, tag = 'input window, operand 0, single buffered']
    #allocation3 [shape = 's32[1]{0}', space=sflag, size = 0x4, scoped, tag = 'scoped memory for tpu_custom_call.1']
    #allocation4 [shape = 's32[1]{0}', space=sflag, size = 0x4, scoped, tag = 'scoped memory for tpu_custom_call.1']
    #allocation5 [shape = 's32[1]{0}', space=sflag, size = 0x4, scoped, tag = 'scoped memory for tpu_custom_call.1']
    #allocation6 [shape = 'u8[512]{0}', space=smem, size = 0x200, scoped, tag = 'input window, operand 1, single buffered']
    #allocation7 [shape = 'u8[32768]{0}', space=vmem, size = 0x8000, scoped, tag = 'input window, operand 2, single buffered']
    %8 = vsyncpa [#allocation4], 0
    %9 = vsyncpa [#allocation5], 0
    %10 = vsyncpa [#allocation3], 0
    // Predicated region
    $region2: #{tpu_custom_call.1} parent=1 // pred_check
      _
    $region3: #{tpu_custom_call.1} parent=1 // pred_check_branch
      %12 = sbr.rel (0) target = $region5
    $region4: #{tpu_custom_call.1} parent=1 // pred_region
      %s14 = ssub.s32 32, 32
      %15 = vsyncadd [#allocation4], %s14
      %18 = dma.hbm_to_smem %s0, 32, [#allocation2], [#allocation4]
    $region5: #{tpu_custom_call.1} parent=1 // pred_fallthru
      _
    // Predicated region
    $region6: #{tpu_custom_call.1} parent=1 // pred_check
      _
    $region7: #{tpu_custom_call.1} parent=1 // pred_check_branch
      %20 = sbr.rel (0) target = $region9
    $region8: #{tpu_custom_call.1} parent=1 // pred_region
      %s22 = ssub.s32 16, 16
      %23 = vsyncadd [#allocation5], %s22
      %s25 = sshll.u32 %s1, 4
      %s26 = int_to_ptr.vmem [resolvable:$true] %s25
      %28 = dma.vmem_to_smem %s26, 16, [#allocation6], [#allocation5]
    $region9: #{tpu_custom_call.1} parent=1 // pred_fallthru
      _
    // Predicated region
    $region10: #{tpu_custom_call.1} parent=1 // pred_check
      _
    $region11: #{tpu_custom_call.1} parent=1 // pred_check_branch
      %30 = sbr.rel (0) target = $region13
    $region12: #{tpu_custom_call.1} parent=1 // pred_region
      %s32 = ssub.s32 1024, 1024
      %33 = vsyncadd [#allocation3], %s32
      %s34 = sshll.u32 [#allocation7], 4
      %s35 = int_to_ptr.vmem [resolvable:$true] %s34
      %40 = dma.hbm_to_vmem [thread:$0]  %s2, 1024, %s35, [#allocation3], 128, 128, 8
    $region13: #{tpu_custom_call.1} parent=1 // pred_fallthru
      _
    // Predicated region
    $region14: #{tpu_custom_call.1} parent=1 // pred_check
      _
    $region15: #{tpu_custom_call.1} parent=1 // pred_check_branch
      %42 = sbr.rel (0) target = $region17
    $region16: #{tpu_custom_call.1} parent=1 // pred_region
      %43 = dma.done [#allocation4], 32
    $region17: #{tpu_custom_call.1} parent=1 // pred_fallthru
      _
    // Predicated region
    $region18: #{tpu_custom_call.1} parent=1 // pred_check
      _
    $region19: #{tpu_custom_call.1} parent=1 // pred_check_branch
      %45 = sbr.rel (0) target = $region21
    $region20: #{tpu_custom_call.1} parent=1 // pred_region
      %46 = dma.done [#allocation5], 16
    $region21: #{tpu_custom_call.1} parent=1 // pred_fallthru
      _
    // Predicated region
    $region22: #{tpu_custom_call.1} parent=1 // pred_check
      _
    $region23: #{tpu_custom_call.1} parent=1 // pred_check_branch
      %48 = sbr.rel (0) target = $region25
    $region24: #{tpu_custom_call.1} parent=1 // pred_region
      %49 = dma.done [#allocation3], 1024
    $region25: #{tpu_custom_call.1} parent=1 // pred_fallthru
      _
    %50 = sfence
    %s51 = sld [smem:[#allocation6]]
    %v52 = vstv %s51
    %s53 = sld [smem:[#allocation6 + $0x1]]
    %v54 = vstv %s53
    %s55 = sld [smem:[#allocation6 + $0x2]]
    %v56 = vstv %s55
    %s57 = sld [smem:[#allocation6 + $0x3]]
    %v58 = vstv %s57
    %v59 = vld [vmem:[#allocation7] sm:$0xff]
    %v60 = vld [vmem:[#allocation7 + $0x8] sm:$0xff]
    %s61 = sld [smem:[#allocation2]]
    %v62 = vstv %s61
    %v63 = vmul.f32 %v62, %v59
    %v64 = vmul.f32 %v62, %v60
    %v65 = vadd.f32 %v52, %v63
    %v66 = vadd.f32 %v52, %v64
    %s67 = sld [smem:[#allocation2 + $0x24]]
    %v68 = vstv %s67
    %v69 = vmul.f32 %v68, %v59
    %v70 = vmul.f32 %v68, %v60
    %v71 = vadd.f32 %v54, %v69
    %v72 = vadd.f32 %v54, %v70
    %s73 = sld [smem:[#allocation2 + $0x48]]
    %v74 = vstv %s73
    %v75 = vmul.f32 %v74, %v59
    %v76 = vmul.f32 %v74, %v60
    %v77 = vadd.f32 %v56, %v75
    %v78 = vadd.f32 %v56, %v76
    %s79 = sld [smem:[#allocation2 + $0x6c]]
    %v80 = vstv %s79
    %v81 = vmul.f32 %v80, %v59
    %v82 = vmul.f32 %v80, %v60
    %v83 = vadd.f32 %v58, %v81
    %v84 = vadd.f32 %v58, %v82
    %s85 = sld [smem:[#allocation2 + $0x1]]
    %v86 = vstv %s85
    %v87 = vmul.f32 %v86, %v59
    %v88 = vmul.f32 %v86, %v60
    %91 = vrot.lane.b32.xlu0 %v87, 127
    %v92 = vpop.permute.xlu0 %91
    %93 = vrot.lane.b32.xlu0 %v88, 127
    %v94 = vpop.permute.xlu0 %93
    %v97 = vadd.f32 %v65, %v92
    %v98 = vadd.f32 %v66, %v94
    %s99 = sld [smem:[#allocation2 + $0x25]]
    %v100 = vstv %s99
    %v101 = vmul.f32 %v100, %v59
    %v102 = vmul.f32 %v100, %v60
    %105 = vrot.lane.b32.xlu0 %v101, 127
    %v106 = vpop.permute.xlu0 %105
    %107 = vrot.lane.b32.xlu0 %v102, 127
    %v108 = vpop.permute.xlu0 %107
    %v111 = vadd.f32 %v71, %v106
    %v112 = vadd.f32 %v72, %v108
    %s113 = sld [smem:[#allocation2 + $0x49]]
    %v114 = vstv %s113
    %v115 = vmul.f32 %v114, %v59
    %v116 = vmul.f32 %v114, %v60
    %119 = vrot.lane.b32.xlu0 %v115, 127
    %v120 = vpop.permute.xlu0 %119
    %121 = vrot.lane.b32.xlu0 %v116, 127
    %v122 = vpop.permute.xlu0 %121
    %v125 = vadd.f32 %v77, %v120
    %v126 = vadd.f32 %v78, %v122
    %s127 = sld [smem:[#allocation2 + $0x6d]]
    %v128 = vstv %s127
    %v129 = vmul.f32 %v128, %v59
    %v130 = vmul.f32 %v128, %v60
    %133 = vrot.lane.b32.xlu0 %v129, 127
    %v134 = vpop.permute.xlu0 %133
    %135 = vrot.lane.b32.xlu0 %v130, 127
    %v136 = vpop.permute.xlu0 %135
    %v139 = vadd.f32 %v83, %v134
    %v140 = vadd.f32 %v84, %v136
    %s141 = sld [smem:[#allocation2 + $0x2]]
    %v142 = vstv %s141
    %v143 = vmul.f32 %v142, %v59
    %v144 = vmul.f32 %v142, %v60
    %147 = vrot.lane.b32.xlu0 %v143, 126
    %v148 = vpop.permute.xlu0 %147
    %149 = vrot.lane.b32.xlu0 %v144, 126
    %v150 = vpop.permute.xlu0 %149
    %v153 = vadd.f32 %v97, %v148
    %v154 = vadd.f32 %v98, %v150
    %s155 = sld [smem:[#allocation2 + $0x26]]
    %v156 = vstv %s155
    %v157 = vmul.f32 %v156, %v59
    %v158 = vmul.f32 %v156, %v60
    %161 = vrot.lane.b32.xlu0 %v157, 126
    %v162 = vpop.permute.xlu0 %161
    %163 = vrot.lane.b32.xlu0 %v158, 126
    %v164 = vpop.permute.xlu0 %163
    %v167 = vadd.f32 %v111, %v162
    %v168 = vadd.f32 %v112, %v164
    %s169 = sld [smem:[#allocation2 + $0x4a]]
    %v170 = vstv %s169
    %v171 = vmul.f32 %v170, %v59
    %v172 = vmul.f32 %v170, %v60
    %175 = vrot.lane.b32.xlu0 %v171, 126
    %v176 = vpop.permute.xlu0 %175
    %177 = vrot.lane.b32.xlu0 %v172, 126
    %v178 = vpop.permute.xlu0 %177
    %v181 = vadd.f32 %v125, %v176
    %v182 = vadd.f32 %v126, %v178
    %s183 = sld [smem:[#allocation2 + $0x6e]]
    %v184 = vstv %s183
    %v185 = vmul.f32 %v184, %v59
    %v186 = vmul.f32 %v184, %v60
    %189 = vrot.lane.b32.xlu0 %v185, 126
    %v190 = vpop.permute.xlu0 %189
    %191 = vrot.lane.b32.xlu0 %v186, 126
    %v192 = vpop.permute.xlu0 %191
    %v195 = vadd.f32 %v139, %v190
    %v196 = vadd.f32 %v140, %v192
    %s197 = sld [smem:[#allocation2 + $0x3]]
    %v198 = vstv %s197
    %v199 = vmul.f32 %v198, %v59
    %v200 = vmul.f32 %v198, %v60
    %vm203 = vcmask 1046528
    %v204 = vrot.slane %v199, 1
    %v205 = vrot.slane %v200, 1
    %v206 = vsel %vm203, %v204, %v205
    %v209 = vadd.f32 %v153, %v206
    %v210 = vadd.f32 %v154, %v205
    %s211 = sld [smem:[#allocation2 + $0x27]]
    %v212 = vstv %s211
    %v213 = vmul.f32 %v212, %v59
    %v214 = vmul.f32 %v212, %v60
    %v217 = vrot.slane %v213, 1
    %v218 = vrot.slane %v214, 1
    %v219 = vsel %vm203, %v217, %v218
    %v222 = vadd.f32 %v167, %v219
    %v223 = vadd.f32 %v168, %v218
    %s224 = sld [smem:[#allocation2 + $0x4b]]
    %v225 = vstv %s224
    %v226 = vmul.f32 %v225, %v59
    %v227 = vmul.f32 %v225, %v60
    %v230 = vrot.slane %v226, 1
    %v231 = vrot.slane %v227, 1
    %v232 = vsel %vm203, %v230, %v231
    %v235 = vadd.f32 %v181, %v232
    %v236 = vadd.f32 %v182, %v231
    %s237 = sld [smem:[#allocation2 + $0x6f]]
    %v238 = vstv %s237
    %v239 = vmul.f32 %v238, %v59
    %v240 = vmul.f32 %v238, %v60
    %v243 = vrot.slane %v239, 1
    %v244 = vrot.slane %v240, 1
    %v245 = vsel %vm203, %v243, %v244
    %v248 = vadd.f32 %v195, %v245
    %v249 = vadd.f32 %v196, %v244
    %s250 = sld [smem:[#allocation2 + $0x4]]
    %v251 = vstv %s250
    %v252 = vmul.f32 %v251, %v59
    %v253 = vmul.f32 %v251, %v60
    %v256 = vrot.slane %v252, 1
    %v257 = vrot.slane %v253, 1
    %v258 = vsel %vm203, %v256, %v257
    %259 = vrot.lane.b32.xlu0 %v258, 127
    %v260 = vpop.permute.xlu0 %259
    %261 = vrot.lane.b32.xlu0 %v257, 127
    %v262 = vpop.permute.xlu0 %261
    %v265 = vadd.f32 %v209, %v260
    %v266 = vadd.f32 %v210, %v262
    %s267 = sld [smem:[#allocation2 + $0x28]]
    %v268 = vstv %s267
    %v269 = vmul.f32 %v268, %v59
    %v270 = vmul.f32 %v268, %v60
    %v273 = vrot.slane %v269, 1
    %v274 = vrot.slane %v270, 1
    %v275 = vsel %vm203, %v273, %v274
    %276 = vrot.lane.b32.xlu0 %v275, 127
    %v277 = vpop.permute.xlu0 %276
    %278 = vrot.lane.b32.xlu0 %v274, 127
    %v279 = vpop.permute.xlu0 %278
    %v282 = vadd.f32 %v222, %v277
    %v283 = vadd.f32 %v223, %v279
    %s284 = sld [smem:[#allocation2 + $0x4c]]
    %v285 = vstv %s284
    %v286 = vmul.f32 %v285, %v59
    %v287 = vmul.f32 %v285, %v60
    %v290 = vrot.slane %v286, 1
    %v291 = vrot.slane %v287, 1
    %v292 = vsel %vm203, %v290, %v291
    %293 = vrot.lane.b32.xlu0 %v292, 127
    %v294 = vpop.permute.xlu0 %293
    %295 = vrot.lane.b32.xlu0 %v291, 127
    %v296 = vpop.permute.xlu0 %295
    %v299 = vadd.f32 %v235, %v294
    %v300 = vadd.f32 %v236, %v296
    %s301 = sld [smem:[#allocation2 + $0x70]]
    %v302 = vstv %s301
    %v303 = vmul.f32 %v302, %v59
    %v304 = vmul.f32 %v302, %v60
    %v307 = vrot.slane %v303, 1
    %v308 = vrot.slane %v304, 1
    %v309 = vsel %vm203, %v307, %v308
    %310 = vrot.lane.b32.xlu0 %v309, 127
    %v311 = vpop.permute.xlu0 %310
    %312 = vrot.lane.b32.xlu0 %v308, 127
    %v313 = vpop.permute.xlu0 %312
    %v316 = vadd.f32 %v248, %v311
    %v317 = vadd.f32 %v249, %v313
    %s318 = sld [smem:[#allocation2 + $0x5]]
    %v319 = vstv %s318
    %v320 = vmul.f32 %v319, %v59
    %v321 = vmul.f32 %v319, %v60
    %v324 = vrot.slane %v320, 1
    %v325 = vrot.slane %v321, 1
    %v326 = vsel %vm203, %v324, %v325
    %327 = vrot.lane.b32.xlu0 %v326, 126
    %v328 = vpop.permute.xlu0 %327
    %329 = vrot.lane.b32.xlu0 %v325, 126
    %v330 = vpop.permute.xlu0 %329
    %v333 = vadd.f32 %v265, %v328
    %v334 = vadd.f32 %v266, %v330
    %s335 = sld [smem:[#allocation2 + $0x29]]
    %v336 = vstv %s335
    %v337 = vmul.f32 %v336, %v59
    %v338 = vmul.f32 %v336, %v60
    %v341 = vrot.slane %v337, 1
    %v342 = vrot.slane %v338, 1
    %v343 = vsel %vm203, %v341, %v342
    %344 = vrot.lane.b32.xlu0 %v343, 126
    %v345 = vpop.permute.xlu0 %344
    %346 = vrot.lane.b32.xlu0 %v342, 126
    %v347 = vpop.permute.xlu0 %346
    %v350 = vadd.f32 %v282, %v345
    %v351 = vadd.f32 %v283, %v347
    %s352 = sld [smem:[#allocation2 + $0x4d]]
    %v353 = vstv %s352
    %v354 = vmul.f32 %v353, %v59
    %v355 = vmul.f32 %v353, %v60
    %v358 = vrot.slane %v354, 1
    %v359 = vrot.slane %v355, 1
    %v360 = vsel %vm203, %v358, %v359
    %361 = vrot.lane.b32.xlu0 %v360, 126
    %v362 = vpop.permute.xlu0 %361
    %363 = vrot.lane.b32.xlu0 %v359, 126
    %v364 = vpop.permute.xlu0 %363
    %v367 = vadd.f32 %v299, %v362
    %v368 = vadd.f32 %v300, %v364
    %s369 = sld [smem:[#allocation2 + $0x71]]
    %v370 = vstv %s369
    %v371 = vmul.f32 %v370, %v59
    %v372 = vmul.f32 %v370, %v60
    %v375 = vrot.slane %v371, 1
    %v376 = vrot.slane %v372, 1
    %v377 = vsel %vm203, %v375, %v376
    %378 = vrot.lane.b32.xlu0 %v377, 126
    %v379 = vpop.permute.xlu0 %378
    %380 = vrot.lane.b32.xlu0 %v376, 126
    %v381 = vpop.permute.xlu0 %380
    %v384 = vadd.f32 %v316, %v379
    %v385 = vadd.f32 %v317, %v381
    %s386 = sld [smem:[#allocation2 + $0x6]]
    %v387 = vstv %s386
    %v388 = vmul.f32 %v387, %v59
    %v389 = vmul.f32 %v387, %v60
    %vm392 = vcmask 1045504
    %v393 = vrot.slane %v388, 2
    %v394 = vrot.slane %v389, 2
    %v395 = vsel %vm392, %v393, %v394
    %v398 = vadd.f32 %v333, %v395
    %v399 = vadd.f32 %v334, %v394
    %s400 = sld [smem:[#allocation2 + $0x2a]]
    %v401 = vstv %s400
    %v402 = vmul.f32 %v401, %v59
    %v403 = vmul.f32 %v401, %v60
    %v406 = vrot.slane %v402, 2
    %v407 = vrot.slane %v403, 2
    %v408 = vsel %vm392, %v406, %v407
    %v411 = vadd.f32 %v350, %v408
    %v412 = vadd.f32 %v351, %v407
    %s413 = sld [smem:[#allocation2 + $0x4e]]
    %v414 = vstv %s413
    %v415 = vmul.f32 %v414, %v59
    %v416 = vmul.f32 %v414, %v60
    %v419 = vrot.slane %v415, 2
    %v420 = vrot.slane %v416, 2
    %v421 = vsel %vm392, %v419, %v420
    %v424 = vadd.f32 %v367, %v421
    %v425 = vadd.f32 %v368, %v420
    %s426 = sld [smem:[#allocation2 + $0x72]]
    %v427 = vstv %s426
    %v428 = vmul.f32 %v427, %v59
    %v429 = vmul.f32 %v427, %v60
    %v432 = vrot.slane %v428, 2
    %v433 = vrot.slane %v429, 2
    %v434 = vsel %vm392, %v432, %v433
    %v437 = vadd.f32 %v384, %v434
    %v438 = vadd.f32 %v385, %v433
    %s439 = sld [smem:[#allocation2 + $0x7]]
    %v440 = vstv %s439
    %v441 = vmul.f32 %v440, %v59
    %v442 = vmul.f32 %v440, %v60
    %v445 = vrot.slane %v441, 2
    %v446 = vrot.slane %v442, 2
    %v447 = vsel %vm392, %v445, %v446
    %448 = vrot.lane.b32.xlu0 %v447, 127
    %v449 = vpop.permute.xlu0 %448
    %450 = vrot.lane.b32.xlu0 %v446, 127
    %v451 = vpop.permute.xlu0 %450
    %v454 = vadd.f32 %v398, %v449
    %v455 = vadd.f32 %v399, %v451
    %s456 = sld [smem:[#allocation2 + $0x2b]]
    %v457 = vstv %s456
    %v458 = vmul.f32 %v457, %v59
    %v459 = vmul.f32 %v457, %v60
    %v462 = vrot.slane %v458, 2
    %v463 = vrot.slane %v459, 2
    %v464 = vsel %vm392, %v462, %v463
    %465 = vrot.lane.b32.xlu0 %v464, 127
    %v466 = vpop.permute.xlu0 %465
    %467 = vrot.lane.b32.xlu0 %v463, 127
    %v468 = vpop.permute.xlu0 %467
    %v471 = vadd.f32 %v411, %v466
    %v472 = vadd.f32 %v412, %v468
    %s473 = sld [smem:[#allocation2 + $0x4f]]
    %v474 = vstv %s473
    %v475 = vmul.f32 %v474, %v59
    %v476 = vmul.f32 %v474, %v60
    %v479 = vrot.slane %v475, 2
    %v480 = vrot.slane %v476, 2
    %v481 = vsel %vm392, %v479, %v480
    %482 = vrot.lane.b32.xlu0 %v481, 127
    %v483 = vpop.permute.xlu0 %482
    %484 = vrot.lane.b32.xlu0 %v480, 127
    %v485 = vpop.permute.xlu0 %484
    %v488 = vadd.f32 %v424, %v483
    %v489 = vadd.f32 %v425, %v485
    %s490 = sld [smem:[#allocation2 + $0x73]]
    %v491 = vstv %s490
    %v492 = vmul.f32 %v491, %v59
    %v493 = vmul.f32 %v491, %v60
    %v496 = vrot.slane %v492, 2
    %v497 = vrot.slane %v493, 2
    %v498 = vsel %vm392, %v496, %v497
    %499 = vrot.lane.b32.xlu0 %v498, 127
    %v500 = vpop.permute.xlu0 %499
    %501 = vrot.lane.b32.xlu0 %v497, 127
    %v502 = vpop.permute.xlu0 %501
    %v505 = vadd.f32 %v437, %v500
    %v506 = vadd.f32 %v438, %v502
    %s507 = sld [smem:[#allocation2 + $0x8]]
    %v508 = vstv %s507
    %v509 = vmul.f32 %v508, %v59
    %v510 = vmul.f32 %v508, %v60
    %v513 = vrot.slane %v509, 2
    %v514 = vrot.slane %v510, 2
    %v515 = vsel %vm392, %v513, %v514
    %516 = vrot.lane.b32.xlu0 %v515, 126
    %v517 = vpop.permute.xlu0 %516
    %518 = vrot.lane.b32.xlu0 %v514, 126
    %v519 = vpop.permute.xlu0 %518
    %v522 = vadd.f32 %v454, %v517
    %v523 = vadd.f32 %v455, %v519
    %s524 = sld [smem:[#allocation2 + $0x2c]]
    %v525 = vstv %s524
    %v526 = vmul.f32 %v525, %v59
    %v527 = vmul.f32 %v525, %v60
    %v530 = vrot.slane %v526, 2
    %v531 = vrot.slane %v527, 2
    %v532 = vsel %vm392, %v530, %v531
    %533 = vrot.lane.b32.xlu0 %v532, 126
    %v534 = vpop.permute.xlu0 %533
    %535 = vrot.lane.b32.xlu0 %v531, 126
    %v536 = vpop.permute.xlu0 %535
    %v539 = vadd.f32 %v471, %v534
    %v540 = vadd.f32 %v472, %v536
    %s541 = sld [smem:[#allocation2 + $0x50]]
    %v542 = vstv %s541
    %v543 = vmul.f32 %v542, %v59
    %v544 = vmul.f32 %v542, %v60
    %v547 = vrot.slane %v543, 2
    %v548 = vrot.slane %v544, 2
    %v549 = vsel %vm392, %v547, %v548
    %550 = vrot.lane.b32.xlu0 %v549, 126
    %v551 = vpop.permute.xlu0 %550
    %552 = vrot.lane.b32.xlu0 %v548, 126
    %v553 = vpop.permute.xlu0 %552
    %v556 = vadd.f32 %v488, %v551
    %v557 = vadd.f32 %v489, %v553
    %s558 = sld [smem:[#allocation2 + $0x74]]
    %v559 = vstv %s558
    %v560 = vmul.f32 %v559, %v59
    %v561 = vmul.f32 %v559, %v60
    %v564 = vrot.slane %v560, 2
    %v565 = vrot.slane %v561, 2
    %v566 = vsel %vm392, %v564, %v565
    %567 = vrot.lane.b32.xlu0 %v566, 126
    %v568 = vpop.permute.xlu0 %567
    %569 = vrot.lane.b32.xlu0 %v565, 126
    %v570 = vpop.permute.xlu0 %569
    %v573 = vadd.f32 %v505, %v568
    %v574 = vadd.f32 %v506, %v570
    %s575 = scalar_lea.vmem [#allocation7], 16
    %v576 = vld [vmem:[%s575] sm:$0xff]
    %v577 = vld [vmem:[%s575 + $0x8] sm:$0xff]
    %s578 = sld [smem:[#allocation2 + $0x9]]
    %v579 = vstv %s578
    %v580 = vmul.f32 %v579, %v576
    %v581 = vmul.f32 %v579, %v577
    %v582 = vadd.f32 %v522, %v580
    %v583 = vadd.f32 %v523, %v581
    %s584 = sld [smem:[#allocation2 + $0x2d]]
    %v585 = vstv %s584
    %v586 = vmul.f32 %v585, %v576
    %v587 = vmul.f32 %v585, %v577
    %v588 = vadd.f32 %v539, %v586
    %v589 = vadd.f32 %v540, %v587
    %s590 = sld [smem:[#allocation2 + $0x51]]
    %v591 = vstv %s590
    %v592 = vmul.f32 %v591, %v576
    %v593 = vmul.f32 %v591, %v577
    %v594 = vadd.f32 %v556, %v592
    %v595 = vadd.f32 %v557, %v593
    %s596 = sld [smem:[#allocation2 + $0x75]]
    %v597 = vstv %s596
    %v598 = vmul.f32 %v597, %v576
    %v599 = vmul.f32 %v597, %v577
    %v600 = vadd.f32 %v573, %v598
    %v601 = vadd.f32 %v574, %v599
    %s602 = sld [smem:[#allocation2 + $0xa]]
    %v603 = vstv %s602
    %v604 = vmul.f32 %v603, %v576
    %v605 = vmul.f32 %v603, %v577
    %608 = vrot.lane.b32.xlu0 %v604, 127
    %v609 = vpop.permute.xlu0 %608
    %610 = vrot.lane.b32.xlu0 %v605, 127
    %v611 = vpop.permute.xlu0 %610
    %v614 = vadd.f32 %v582, %v609
    %v615 = vadd.f32 %v583, %v611
    %s616 = sld [smem:[#allocation2 + $0x2e]]
    %v617 = vstv %s616
    %v618 = vmul.f32 %v617, %v576
    %v619 = vmul.f32 %v617, %v577
    %622 = vrot.lane.b32.xlu0 %v618, 127
    %v623 = vpop.permute.xlu0 %622
    %624 = vrot.lane.b32.xlu0 %v619, 127
    %v625 = vpop.permute.xlu0 %624
    %v628 = vadd.f32 %v588, %v623
    %v629 = vadd.f32 %v589, %v625
    %s630 = sld [smem:[#allocation2 + $0x52]]
    %v631 = vstv %s630
    %v632 = vmul.f32 %v631, %v576
    %v633 = vmul.f32 %v631, %v577
    %636 = vrot.lane.b32.xlu0 %v632, 127
    %v637 = vpop.permute.xlu0 %636
    %638 = vrot.lane.b32.xlu0 %v633, 127
    %v639 = vpop.permute.xlu0 %638
    %v642 = vadd.f32 %v594, %v637
    %v643 = vadd.f32 %v595, %v639
    %s644 = sld [smem:[#allocation2 + $0x76]]
    %v645 = vstv %s644
    %v646 = vmul.f32 %v645, %v576
    %v647 = vmul.f32 %v645, %v577
    %650 = vrot.lane.b32.xlu0 %v646, 127
    %v651 = vpop.permute.xlu0 %650
    %652 = vrot.lane.b32.xlu0 %v647, 127
    %v653 = vpop.permute.xlu0 %652
    %v656 = vadd.f32 %v600, %v651
    %v657 = vadd.f32 %v601, %v653
    %s658 = sld [smem:[#allocation2 + $0xb]]
    %v659 = vstv %s658
    %v660 = vmul.f32 %v659, %v576
    %v661 = vmul.f32 %v659, %v577
    %664 = vrot.lane.b32.xlu0 %v660, 126
    %v665 = vpop.permute.xlu0 %664
    %666 = vrot.lane.b32.xlu0 %v661, 126
    %v667 = vpop.permute.xlu0 %666
    %v670 = vadd.f32 %v614, %v665
    %v671 = vadd.f32 %v615, %v667
    %s672 = sld [smem:[#allocation2 + $0x2f]]
    %v673 = vstv %s672
    %v674 = vmul.f32 %v673, %v576
    %v675 = vmul.f32 %v673, %v577
    %678 = vrot.lane.b32.xlu0 %v674, 126
    %v679 = vpop.permute.xlu0 %678
    %680 = vrot.lane.b32.xlu0 %v675, 126
    %v681 = vpop.permute.xlu0 %680
    %v684 = vadd.f32 %v628, %v679
    %v685 = vadd.f32 %v629, %v681
    %s686 = sld [smem:[#allocation2 + $0x53]]
    %v687 = vstv %s686
    %v688 = vmul.f32 %v687, %v576
    %v689 = vmul.f32 %v687, %v577
    %692 = vrot.lane.b32.xlu0 %v688, 126
    %v693 = vpop.permute.xlu0 %692
    %694 = vrot.lane.b32.xlu0 %v689, 126
    %v695 = vpop.permute.xlu0 %694
    %v698 = vadd.f32 %v642, %v693
    %v699 = vadd.f32 %v643, %v695
    %s700 = sld [smem:[#allocation2 + $0x77]]
    %v701 = vstv %s700
    %v702 = vmul.f32 %v701, %v576
    %v703 = vmul.f32 %v701, %v577
    %706 = vrot.lane.b32.xlu0 %v702, 126
    %v707 = vpop.permute.xlu0 %706
    %708 = vrot.lane.b32.xlu0 %v703, 126
    %v709 = vpop.permute.xlu0 %708
    %v712 = vadd.f32 %v656, %v707
    %v713 = vadd.f32 %v657, %v709
    %s714 = sld [smem:[#allocation2 + $0xc]]
    %v715 = vstv %s714
    %v716 = vmul.f32 %v715, %v576
    %v717 = vmul.f32 %v715, %v577
    %v720 = vrot.slane %v716, 1
    %v721 = vrot.slane %v717, 1
    %v722 = vsel %vm203, %v720, %v721
    %v725 = vadd.f32 %v670, %v722
    %v726 = vadd.f32 %v671, %v721
    %s727 = sld [smem:[#allocation2 + $0x30]]
    %v728 = vstv %s727
    %v729 = vmul.f32 %v728, %v576
    %v730 = vmul.f32 %v728, %v577
    %v733 = vrot.slane %v729, 1
    %v734 = vrot.slane %v730, 1
    %v735 = vsel %vm203, %v733, %v734
    %v738 = vadd.f32 %v684, %v735
    %v739 = vadd.f32 %v685, %v734
    %s740 = sld [smem:[#allocation2 + $0x54]]
    %v741 = vstv %s740
    %v742 = vmul.f32 %v741, %v576
    %v743 = vmul.f32 %v741, %v577
    %v746 = vrot.slane %v742, 1
    %v747 = vrot.slane %v743, 1
    %v748 = vsel %vm203, %v746, %v747
    %v751 = vadd.f32 %v698, %v748
    %v752 = vadd.f32 %v699, %v747
    %s753 = sld [smem:[#allocation2 + $0x78]]
    %v754 = vstv %s753
    %v755 = vmul.f32 %v754, %v576
    %v756 = vmul.f32 %v754, %v577
    %v759 = vrot.slane %v755, 1
    %v760 = vrot.slane %v756, 1
    %v761 = vsel %vm203, %v759, %v760
    %v764 = vadd.f32 %v712, %v761
    %v765 = vadd.f32 %v713, %v760
    %s766 = sld [smem:[#allocation2 + $0xd]]
    %v767 = vstv %s766
    %v768 = vmul.f32 %v767, %v576
    %v769 = vmul.f32 %v767, %v577
    %v772 = vrot.slane %v768, 1
    %v773 = vrot.slane %v769, 1
    %v774 = vsel %vm203, %v772, %v773
    %775 = vrot.lane.b32.xlu0 %v774, 127
    %v776 = vpop.permute.xlu0 %775
    %777 = vrot.lane.b32.xlu0 %v773, 127
    %v778 = vpop.permute.xlu0 %777
    %v781 = vadd.f32 %v725, %v776
    %v782 = vadd.f32 %v726, %v778
    %s783 = sld [smem:[#allocation2 + $0x31]]
    %v784 = vstv %s783
    %v785 = vmul.f32 %v784, %v576
    %v786 = vmul.f32 %v784, %v577
    %v789 = vrot.slane %v785, 1
    %v790 = vrot.slane %v786, 1
    %v791 = vsel %vm203, %v789, %v790
    %792 = vrot.lane.b32.xlu0 %v791, 127
    %v793 = vpop.permute.xlu0 %792
    %794 = vrot.lane.b32.xlu0 %v790, 127
    %v795 = vpop.permute.xlu0 %794
    %v798 = vadd.f32 %v738, %v793
    %v799 = vadd.f32 %v739, %v795
    %s800 = sld [smem:[#allocation2 + $0x55]]
    %v801 = vstv %s800
    %v802 = vmul.f32 %v801, %v576
    %v803 = vmul.f32 %v801, %v577
    %v806 = vrot.slane %v802, 1
    %v807 = vrot.slane %v803, 1
    %v808 = vsel %vm203, %v806, %v807
    %809 = vrot.lane.b32.xlu0 %v808, 127
    %v810 = vpop.permute.xlu0 %809
    %811 = vrot.lane.b32.xlu0 %v807, 127
    %v812 = vpop.permute.xlu0 %811
    %v815 = vadd.f32 %v751, %v810
    %v816 = vadd.f32 %v752, %v812
    %s817 = sld [smem:[#allocation2 + $0x79]]
    %v818 = vstv %s817
    %v819 = vmul.f32 %v818, %v576
    %v820 = vmul.f32 %v818, %v577
    %v823 = vrot.slane %v819, 1
    %v824 = vrot.slane %v820, 1
    %v825 = vsel %vm203, %v823, %v824
    %826 = vrot.lane.b32.xlu0 %v825, 127
    %v827 = vpop.permute.xlu0 %826
    %828 = vrot.lane.b32.xlu0 %v824, 127
    %v829 = vpop.permute.xlu0 %828
    %v832 = vadd.f32 %v764, %v827
    %v833 = vadd.f32 %v765, %v829
    %s834 = sld [smem:[#allocation2 + $0xe]]
    %v835 = vstv %s834
    %v836 = vmul.f32 %v835, %v576
    %v837 = vmul.f32 %v835, %v577
    %v840 = vrot.slane %v836, 1
    %v841 = vrot.slane %v837, 1
    %v842 = vsel %vm203, %v840, %v841
    %843 = vrot.lane.b32.xlu0 %v842, 126
    %v844 = vpop.permute.xlu0 %843
    %845 = vrot.lane.b32.xlu0 %v841, 126
    %v846 = vpop.permute.xlu0 %845
    %v849 = vadd.f32 %v781, %v844
    %v850 = vadd.f32 %v782, %v846
    %s851 = sld [smem:[#allocation2 + $0x32]]
    %v852 = vstv %s851
    %v853 = vmul.f32 %v852, %v576
    %v854 = vmul.f32 %v852, %v577
    %v857 = vrot.slane %v853, 1
    %v858 = vrot.slane %v854, 1
    %v859 = vsel %vm203, %v857, %v858
    %860 = vrot.lane.b32.xlu0 %v859, 126
    %v861 = vpop.permute.xlu0 %860
    %862 = vrot.lane.b32.xlu0 %v858, 126
    %v863 = vpop.permute.xlu0 %862
    %v866 = vadd.f32 %v798, %v861
    %v867 = vadd.f32 %v799, %v863
    %s868 = sld [smem:[#allocation2 + $0x56]]
    %v869 = vstv %s868
    %v870 = vmul.f32 %v869, %v576
    %v871 = vmul.f32 %v869, %v577
    %v874 = vrot.slane %v870, 1
    %v875 = vrot.slane %v871, 1
    %v876 = vsel %vm203, %v874, %v875
    %877 = vrot.lane.b32.xlu0 %v876, 126
    %v878 = vpop.permute.xlu0 %877
    %879 = vrot.lane.b32.xlu0 %v875, 126
    %v880 = vpop.permute.xlu0 %879
    %v883 = vadd.f32 %v815, %v878
    %v884 = vadd.f32 %v816, %v880
    %s885 = sld [smem:[#allocation2 + $0x7a]]
    %v886 = vstv %s885
    %v887 = vmul.f32 %v886, %v576
    %v888 = vmul.f32 %v886, %v577
    %v891 = vrot.slane %v887, 1
    %v892 = vrot.slane %v888, 1
    %v893 = vsel %vm203, %v891, %v892
    %894 = vrot.lane.b32.xlu0 %v893, 126
    %v895 = vpop.permute.xlu0 %894
    %896 = vrot.lane.b32.xlu0 %v892, 126
    %v897 = vpop.permute.xlu0 %896
    %v900 = vadd.f32 %v832, %v895
    %v901 = vadd.f32 %v833, %v897
    %s902 = sld [smem:[#allocation2 + $0xf]]
    %v903 = vstv %s902
    %v904 = vmul.f32 %v903, %v576
    %v905 = vmul.f32 %v903, %v577
    %v908 = vrot.slane %v904, 2
    %v909 = vrot.slane %v905, 2
    %v910 = vsel %vm392, %v908, %v909
    %v913 = vadd.f32 %v849, %v910
    %v914 = vadd.f32 %v850, %v909
    %s915 = sld [smem:[#allocation2 + $0x33]]
    %v916 = vstv %s915
    %v917 = vmul.f32 %v916, %v576
    %v918 = vmul.f32 %v916, %v577
    %v921 = vrot.slane %v917, 2
    %v922 = vrot.slane %v918, 2
    %v923 = vsel %vm392, %v921, %v922
    %v926 = vadd.f32 %v866, %v923
    %v927 = vadd.f32 %v867, %v922
    %s928 = sld [smem:[#allocation2 + $0x57]]
    %v929 = vstv %s928
    %v930 = vmul.f32 %v929, %v576
    %v931 = vmul.f32 %v929, %v577
    %v934 = vrot.slane %v930, 2
    %v935 = vrot.slane %v931, 2
    %v936 = vsel %vm392, %v934, %v935
    %v939 = vadd.f32 %v883, %v936
    %v940 = vadd.f32 %v884, %v935
    %s941 = sld [smem:[#allocation2 + $0x7b]]
    %v942 = vstv %s941
    %v943 = vmul.f32 %v942, %v576
    %v944 = vmul.f32 %v942, %v577
    %v947 = vrot.slane %v943, 2
    %v948 = vrot.slane %v944, 2
    %v949 = vsel %vm392, %v947, %v948
    %v952 = vadd.f32 %v900, %v949
    %v953 = vadd.f32 %v901, %v948
    %s954 = sld [smem:[#allocation2 + $0x10]]
    %v955 = vstv %s954
    %v956 = vmul.f32 %v955, %v576
    %v957 = vmul.f32 %v955, %v577
    %v960 = vrot.slane %v956, 2
    %v961 = vrot.slane %v957, 2
    %v962 = vsel %vm392, %v960, %v961
    %963 = vrot.lane.b32.xlu0 %v962, 127
    %v964 = vpop.permute.xlu0 %963
    %965 = vrot.lane.b32.xlu0 %v961, 127
    %v966 = vpop.permute.xlu0 %965
    %v969 = vadd.f32 %v913, %v964
    %v970 = vadd.f32 %v914, %v966
    %s971 = sld [smem:[#allocation2 + $0x34]]
    %v972 = vstv %s971
    %v973 = vmul.f32 %v972, %v576
    %v974 = vmul.f32 %v972, %v577
    %v977 = vrot.slane %v973, 2
    %v978 = vrot.slane %v974, 2
    %v979 = vsel %vm392, %v977, %v978
    %980 = vrot.lane.b32.xlu0 %v979, 127
    %v981 = vpop.permute.xlu0 %980
    %982 = vrot.lane.b32.xlu0 %v978, 127
    %v983 = vpop.permute.xlu0 %982
    %v986 = vadd.f32 %v926, %v981
    %v987 = vadd.f32 %v927, %v983
    %s988 = sld [smem:[#allocation2 + $0x58]]
    %v989 = vstv %s988
    %v990 = vmul.f32 %v989, %v576
    %v991 = vmul.f32 %v989, %v577
    %v994 = vrot.slane %v990, 2
    %v995 = vrot.slane %v991, 2
    %v996 = vsel %vm392, %v994, %v995
    %997 = vrot.lane.b32.xlu0 %v996, 127
    %v998 = vpop.permute.xlu0 %997
    %999 = vrot.lane.b32.xlu0 %v995, 127
    %v1000 = vpop.permute.xlu0 %999
    %v1003 = vadd.f32 %v939, %v998
    %v1004 = vadd.f32 %v940, %v1000
    %s1005 = sld [smem:[#allocation2 + $0x7c]]
    %v1006 = vstv %s1005
    %v1007 = vmul.f32 %v1006, %v576
    %v1008 = vmul.f32 %v1006, %v577
    %v1011 = vrot.slane %v1007, 2
    %v1012 = vrot.slane %v1008, 2
    %v1013 = vsel %vm392, %v1011, %v1012
    %1014 = vrot.lane.b32.xlu0 %v1013, 127
    %v1015 = vpop.permute.xlu0 %1014
    %1016 = vrot.lane.b32.xlu0 %v1012, 127
    %v1017 = vpop.permute.xlu0 %1016
    %v1020 = vadd.f32 %v952, %v1015
    %v1021 = vadd.f32 %v953, %v1017
    %s1022 = sld [smem:[#allocation2 + $0x11]]
    %v1023 = vstv %s1022
    %v1024 = vmul.f32 %v1023, %v576
    %v1025 = vmul.f32 %v1023, %v577
    %v1028 = vrot.slane %v1024, 2
    %v1029 = vrot.slane %v1025, 2
    %v1030 = vsel %vm392, %v1028, %v1029
    %1031 = vrot.lane.b32.xlu0 %v1030, 126
    %v1032 = vpop.permute.xlu0 %1031
    %1033 = vrot.lane.b32.xlu0 %v1029, 126
    %v1034 = vpop.permute.xlu0 %1033
    %v1037 = vadd.f32 %v969, %v1032
    %v1038 = vadd.f32 %v970, %v1034
    %s1039 = sld [smem:[#allocation2 + $0x35]]
    %v1040 = vstv %s1039
    %v1041 = vmul.f32 %v1040, %v576
    %v1042 = vmul.f32 %v1040, %v577
    %v1045 = vrot.slane %v1041, 2
    %v1046 = vrot.slane %v1042, 2
    %v1047 = vsel %vm392, %v1045, %v1046
    %1048 = vrot.lane.b32.xlu0 %v1047, 126
    %v1049 = vpop.permute.xlu0 %1048
    %1050 = vrot.lane.b32.xlu0 %v1046, 126
    %v1051 = vpop.permute.xlu0 %1050
    %v1054 = vadd.f32 %v986, %v1049
    %v1055 = vadd.f32 %v987, %v1051
    %s1056 = sld [smem:[#allocation2 + $0x59]]
    %v1057 = vstv %s1056
    %v1058 = vmul.f32 %v1057, %v576
    %v1059 = vmul.f32 %v1057, %v577
    %v1062 = vrot.slane %v1058, 2
    %v1063 = vrot.slane %v1059, 2
    %v1064 = vsel %vm392, %v1062, %v1063
    %1065 = vrot.lane.b32.xlu0 %v1064, 126
    %v1066 = vpop.permute.xlu0 %1065
    %1067 = vrot.lane.b32.xlu0 %v1063, 126
    %v1068 = vpop.permute.xlu0 %1067
    %v1071 = vadd.f32 %v1003, %v1066
    %v1072 = vadd.f32 %v1004, %v1068
    %s1073 = sld [smem:[#allocation2 + $0x7d]]
    %v1074 = vstv %s1073
    %v1075 = vmul.f32 %v1074, %v576
    %v1076 = vmul.f32 %v1074, %v577
    %v1079 = vrot.slane %v1075, 2
    %v1080 = vrot.slane %v1076, 2
    %v1081 = vsel %vm392, %v1079, %v1080
    %1082 = vrot.lane.b32.xlu0 %v1081, 126
    %v1083 = vpop.permute.xlu0 %1082
    %1084 = vrot.lane.b32.xlu0 %v1080, 126
    %v1085 = vpop.permute.xlu0 %1084
    %v1088 = vadd.f32 %v1020, %v1083
    %v1089 = vadd.f32 %v1021, %v1085
    %s1090 = scalar_lea.vmem [#allocation7], 32
    %v1091 = vld [vmem:[%s1090] sm:$0xff]
    %v1092 = vld [vmem:[%s1090 + $0x8] sm:$0xff]
    %s1093 = sld [smem:[#allocation2 + $0x12]]
    %v1094 = vstv %s1093
    %v1095 = vmul.f32 %v1094, %v1091
    %v1096 = vmul.f32 %v1094, %v1092
    %v1097 = vadd.f32 %v1037, %v1095
    %v1098 = vadd.f32 %v1038, %v1096
    %s1099 = sld [smem:[#allocation2 + $0x36]]
    %v1100 = vstv %s1099
    %v1101 = vmul.f32 %v1100, %v1091
    %v1102 = vmul.f32 %v1100, %v1092
    %v1103 = vadd.f32 %v1054, %v1101
    %v1104 = vadd.f32 %v1055, %v1102
    %s1105 = sld [smem:[#allocation2 + $0x5a]]
    %v1106 = vstv %s1105
    %v1107 = vmul.f32 %v1106, %v1091
    %v1108 = vmul.f32 %v1106, %v1092
    %v1109 = vadd.f32 %v1071, %v1107
    %v1110 = vadd.f32 %v1072, %v1108
    %s1111 = sld [smem:[#allocation2 + $0x7e]]
    %v1112 = vstv %s1111
    %v1113 = vmul.f32 %v1112, %v1091
    %v1114 = vmul.f32 %v1112, %v1092
    %v1115 = vadd.f32 %v1088, %v1113
    %v1116 = vadd.f32 %v1089, %v1114
    %s1117 = sld [smem:[#allocation2 + $0x13]]
    %v1118 = vstv %s1117
    %v1119 = vmul.f32 %v1118, %v1091
    %v1120 = vmul.f32 %v1118, %v1092
    %1123 = vrot.lane.b32.xlu0 %v1119, 127
    %v1124 = vpop.permute.xlu0 %1123
    %1125 = vrot.lane.b32.xlu0 %v1120, 127
    %v1126 = vpop.permute.xlu0 %1125
    %v1129 = vadd.f32 %v1097, %v1124
    %v1130 = vadd.f32 %v1098, %v1126
    %s1131 = sld [smem:[#allocation2 + $0x37]]
    %v1132 = vstv %s1131
    %v1133 = vmul.f32 %v1132, %v1091
    %v1134 = vmul.f32 %v1132, %v1092
    %1137 = vrot.lane.b32.xlu0 %v1133, 127
    %v1138 = vpop.permute.xlu0 %1137
    %1139 = vrot.lane.b32.xlu0 %v1134, 127
    %v1140 = vpop.permute.xlu0 %1139
    %v1143 = vadd.f32 %v1103, %v1138
    %v1144 = vadd.f32 %v1104, %v1140
    %s1145 = sld [smem:[#allocation2 + $0x5b]]
    %v1146 = vstv %s1145
    %v1147 = vmul.f32 %v1146, %v1091
    %v1148 = vmul.f32 %v1146, %v1092
    %1151 = vrot.lane.b32.xlu0 %v1147, 127
    %v1152 = vpop.permute.xlu0 %1151
    %1153 = vrot.lane.b32.xlu0 %v1148, 127
    %v1154 = vpop.permute.xlu0 %1153
    %v1157 = vadd.f32 %v1109, %v1152
    %v1158 = vadd.f32 %v1110, %v1154
    %s1159 = sld [smem:[#allocation2 + $0x7f]]
    %v1160 = vstv %s1159
    %v1161 = vmul.f32 %v1160, %v1091
    %v1162 = vmul.f32 %v1160, %v1092
    %1165 = vrot.lane.b32.xlu0 %v1161, 127
    %v1166 = vpop.permute.xlu0 %1165
    %1167 = vrot.lane.b32.xlu0 %v1162, 127
    %v1168 = vpop.permute.xlu0 %1167
    %v1171 = vadd.f32 %v1115, %v1166
    %v1172 = vadd.f32 %v1116, %v1168
    %s1173 = sld [smem:[#allocation2 + $0x14]]
    %v1174 = vstv %s1173
    %v1175 = vmul.f32 %v1174, %v1091
    %v1176 = vmul.f32 %v1174, %v1092
    %1179 = vrot.lane.b32.xlu0 %v1175, 126
    %v1180 = vpop.permute.xlu0 %1179
    %1181 = vrot.lane.b32.xlu0 %v1176, 126
    %v1182 = vpop.permute.xlu0 %1181
    %v1185 = vadd.f32 %v1129, %v1180
    %v1186 = vadd.f32 %v1130, %v1182
    %s1187 = sld [smem:[#allocation2 + $0x38]]
    %v1188 = vstv %s1187
    %v1189 = vmul.f32 %v1188, %v1091
    %v1190 = vmul.f32 %v1188, %v1092
    %1193 = vrot.lane.b32.xlu0 %v1189, 126
    %v1194 = vpop.permute.xlu0 %1193
    %1195 = vrot.lane.b32.xlu0 %v1190, 126
    %v1196 = vpop.permute.xlu0 %1195
    %v1199 = vadd.f32 %v1143, %v1194
    %v1200 = vadd.f32 %v1144, %v1196
    %s1201 = sld [smem:[#allocation2 + $0x5c]]
    %v1202 = vstv %s1201
    %v1203 = vmul.f32 %v1202, %v1091
    %v1204 = vmul.f32 %v1202, %v1092
    %1207 = vrot.lane.b32.xlu0 %v1203, 126
    %v1208 = vpop.permute.xlu0 %1207
    %1209 = vrot.lane.b32.xlu0 %v1204, 126
    %v1210 = vpop.permute.xlu0 %1209
    %v1213 = vadd.f32 %v1157, %v1208
    %v1214 = vadd.f32 %v1158, %v1210
    %s1215 = sld [smem:[#allocation2 + $0x80]]
    %v1216 = vstv %s1215
    %v1217 = vmul.f32 %v1216, %v1091
    %v1218 = vmul.f32 %v1216, %v1092
    %1221 = vrot.lane.b32.xlu0 %v1217, 126
    %v1222 = vpop.permute.xlu0 %1221
    %1223 = vrot.lane.b32.xlu0 %v1218, 126
    %v1224 = vpop.permute.xlu0 %1223
    %v1227 = vadd.f32 %v1171, %v1222
    %v1228 = vadd.f32 %v1172, %v1224
    %s1229 = sld [smem:[#allocation2 + $0x15]]
    %v1230 = vstv %s1229
    %v1231 = vmul.f32 %v1230, %v1091
    %v1232 = vmul.f32 %v1230, %v1092
    %v1235 = vrot.slane %v1231, 1
    %v1236 = vrot.slane %v1232, 1
    %v1237 = vsel %vm203, %v1235, %v1236
    %v1240 = vadd.f32 %v1185, %v1237
    %v1241 = vadd.f32 %v1186, %v1236
    %s1242 = sld [smem:[#allocation2 + $0x39]]
    %v1243 = vstv %s1242
    %v1244 = vmul.f32 %v1243, %v1091
    %v1245 = vmul.f32 %v1243, %v1092
    %v1248 = vrot.slane %v1244, 1
    %v1249 = vrot.slane %v1245, 1
    %v1250 = vsel %vm203, %v1248, %v1249
    %v1253 = vadd.f32 %v1199, %v1250
    %v1254 = vadd.f32 %v1200, %v1249
    %s1255 = sld [smem:[#allocation2 + $0x5d]]
    %v1256 = vstv %s1255
    %v1257 = vmul.f32 %v1256, %v1091
    %v1258 = vmul.f32 %v1256, %v1092
    %v1261 = vrot.slane %v1257, 1
    %v1262 = vrot.slane %v1258, 1
    %v1263 = vsel %vm203, %v1261, %v1262
    %v1266 = vadd.f32 %v1213, %v1263
    %v1267 = vadd.f32 %v1214, %v1262
    %s1268 = sld [smem:[#allocation2 + $0x81]]
    %v1269 = vstv %s1268
    %v1270 = vmul.f32 %v1269, %v1091
    %v1271 = vmul.f32 %v1269, %v1092
    %v1274 = vrot.slane %v1270, 1
    %v1275 = vrot.slane %v1271, 1
    %v1276 = vsel %vm203, %v1274, %v1275
    %v1279 = vadd.f32 %v1227, %v1276
    %v1280 = vadd.f32 %v1228, %v1275
    %s1281 = sld [smem:[#allocation2 + $0x16]]
    %v1282 = vstv %s1281
    %v1283 = vmul.f32 %v1282, %v1091
    %v1284 = vmul.f32 %v1282, %v1092
    %v1287 = vrot.slane %v1283, 1
    %v1288 = vrot.slane %v1284, 1
    %v1289 = vsel %vm203, %v1287, %v1288
    %1290 = vrot.lane.b32.xlu0 %v1289, 127
    %v1291 = vpop.permute.xlu0 %1290
    %1292 = vrot.lane.b32.xlu0 %v1288, 127
    %v1293 = vpop.permute.xlu0 %1292
    %v1296 = vadd.f32 %v1240, %v1291
    %v1297 = vadd.f32 %v1241, %v1293
    %s1298 = sld [smem:[#allocation2 + $0x3a]]
    %v1299 = vstv %s1298
    %v1300 = vmul.f32 %v1299, %v1091
    %v1301 = vmul.f32 %v1299, %v1092
    %v1304 = vrot.slane %v1300, 1
    %v1305 = vrot.slane %v1301, 1
    %v1306 = vsel %vm203, %v1304, %v1305
    %1307 = vrot.lane.b32.xlu0 %v1306, 127
    %v1308 = vpop.permute.xlu0 %1307
    %1309 = vrot.lane.b32.xlu0 %v1305, 127
    %v1310 = vpop.permute.xlu0 %1309
    %v1313 = vadd.f32 %v1253, %v1308
    %v1314 = vadd.f32 %v1254, %v1310
    %s1315 = sld [smem:[#allocation2 + $0x5e]]
    %v1316 = vstv %s1315
    %v1317 = vmul.f32 %v1316, %v1091
    %v1318 = vmul.f32 %v1316, %v1092
    %v1321 = vrot.slane %v1317, 1
    %v1322 = vrot.slane %v1318, 1
    %v1323 = vsel %vm203, %v1321, %v1322
    %1324 = vrot.lane.b32.xlu0 %v1323, 127
    %v1325 = vpop.permute.xlu0 %1324
    %1326 = vrot.lane.b32.xlu0 %v1322, 127
    %v1327 = vpop.permute.xlu0 %1326
    %v1330 = vadd.f32 %v1266, %v1325
    %v1331 = vadd.f32 %v1267, %v1327
    %s1332 = sld [smem:[#allocation2 + $0x82]]
    %v1333 = vstv %s1332
    %v1334 = vmul.f32 %v1333, %v1091
    %v1335 = vmul.f32 %v1333, %v1092
    %v1338 = vrot.slane %v1334, 1
    %v1339 = vrot.slane %v1335, 1
    %v1340 = vsel %vm203, %v1338, %v1339
    %1341 = vrot.lane.b32.xlu0 %v1340, 127
    %v1342 = vpop.permute.xlu0 %1341
    %1343 = vrot.lane.b32.xlu0 %v1339, 127
    %v1344 = vpop.permute.xlu0 %1343
    %v1347 = vadd.f32 %v1279, %v1342
    %v1348 = vadd.f32 %v1280, %v1344
    %s1349 = sld [smem:[#allocation2 + $0x17]]
    %v1350 = vstv %s1349
    %v1351 = vmul.f32 %v1350, %v1091
    %v1352 = vmul.f32 %v1350, %v1092
    %v1355 = vrot.slane %v1351, 1
    %v1356 = vrot.slane %v1352, 1
    %v1357 = vsel %vm203, %v1355, %v1356
    %1358 = vrot.lane.b32.xlu0 %v1357, 126
    %v1359 = vpop.permute.xlu0 %1358
    %1360 = vrot.lane.b32.xlu0 %v1356, 126
    %v1361 = vpop.permute.xlu0 %1360
    %v1364 = vadd.f32 %v1296, %v1359
    %v1365 = vadd.f32 %v1297, %v1361
    %s1366 = sld [smem:[#allocation2 + $0x3b]]
    %v1367 = vstv %s1366
    %v1368 = vmul.f32 %v1367, %v1091
    %v1369 = vmul.f32 %v1367, %v1092
    %v1372 = vrot.slane %v1368, 1
    %v1373 = vrot.slane %v1369, 1
    %v1374 = vsel %vm203, %v1372, %v1373
    %1375 = vrot.lane.b32.xlu0 %v1374, 126
    %v1376 = vpop.permute.xlu0 %1375
    %1377 = vrot.lane.b32.xlu0 %v1373, 126
    %v1378 = vpop.permute.xlu0 %1377
    %v1381 = vadd.f32 %v1313, %v1376
    %v1382 = vadd.f32 %v1314, %v1378
    %s1383 = sld [smem:[#allocation2 + $0x5f]]
    %v1384 = vstv %s1383
    %v1385 = vmul.f32 %v1384, %v1091
    %v1386 = vmul.f32 %v1384, %v1092
    %v1389 = vrot.slane %v1385, 1
    %v1390 = vrot.slane %v1386, 1
    %v1391 = vsel %vm203, %v1389, %v1390
    %1392 = vrot.lane.b32.xlu0 %v1391, 126
    %v1393 = vpop.permute.xlu0 %1392
    %1394 = vrot.lane.b32.xlu0 %v1390, 126
    %v1395 = vpop.permute.xlu0 %1394
    %v1398 = vadd.f32 %v1330, %v1393
    %v1399 = vadd.f32 %v1331, %v1395
    %s1400 = sld [smem:[#allocation2 + $0x83]]
    %v1401 = vstv %s1400
    %v1402 = vmul.f32 %v1401, %v1091
    %v1403 = vmul.f32 %v1401, %v1092
    %v1406 = vrot.slane %v1402, 1
    %v1407 = vrot.slane %v1403, 1
    %v1408 = vsel %vm203, %v1406, %v1407
    %1409 = vrot.lane.b32.xlu0 %v1408, 126
    %v1410 = vpop.permute.xlu0 %1409
    %1411 = vrot.lane.b32.xlu0 %v1407, 126
    %v1412 = vpop.permute.xlu0 %1411
    %v1415 = vadd.f32 %v1347, %v1410
    %v1416 = vadd.f32 %v1348, %v1412
    %s1417 = sld [smem:[#allocation2 + $0x18]]
    %v1418 = vstv %s1417
    %v1419 = vmul.f32 %v1418, %v1091
    %v1420 = vmul.f32 %v1418, %v1092
    %v1423 = vrot.slane %v1419, 2
    %v1424 = vrot.slane %v1420, 2
    %v1425 = vsel %vm392, %v1423, %v1424
    %v1428 = vadd.f32 %v1364, %v1425
    %v1429 = vadd.f32 %v1365, %v1424
    %s1430 = sld [smem:[#allocation2 + $0x3c]]
    %v1431 = vstv %s1430
    %v1432 = vmul.f32 %v1431, %v1091
    %v1433 = vmul.f32 %v1431, %v1092
    %v1436 = vrot.slane %v1432, 2
    %v1437 = vrot.slane %v1433, 2
    %v1438 = vsel %vm392, %v1436, %v1437
    %v1441 = vadd.f32 %v1381, %v1438
    %v1442 = vadd.f32 %v1382, %v1437
    %s1443 = sld [smem:[#allocation2 + $0x60]]
    %v1444 = vstv %s1443
    %v1445 = vmul.f32 %v1444, %v1091
    %v1446 = vmul.f32 %v1444, %v1092
    %v1449 = vrot.slane %v1445, 2
    %v1450 = vrot.slane %v1446, 2
    %v1451 = vsel %vm392, %v1449, %v1450
    %v1454 = vadd.f32 %v1398, %v1451
    %v1455 = vadd.f32 %v1399, %v1450
    %s1456 = sld [smem:[#allocation2 + $0x84]]
    %v1457 = vstv %s1456
    %v1458 = vmul.f32 %v1457, %v1091
    %v1459 = vmul.f32 %v1457, %v1092
    %v1462 = vrot.slane %v1458, 2
    %v1463 = vrot.slane %v1459, 2
    %v1464 = vsel %vm392, %v1462, %v1463
    %v1467 = vadd.f32 %v1415, %v1464
    %v1468 = vadd.f32 %v1416, %v1463
    %s1469 = sld [smem:[#allocation2 + $0x19]]
    %v1470 = vstv %s1469
    %v1471 = vmul.f32 %v1470, %v1091
    %v1472 = vmul.f32 %v1470, %v1092
    %v1475 = vrot.slane %v1471, 2
    %v1476 = vrot.slane %v1472, 2
    %v1477 = vsel %vm392, %v1475, %v1476
    %1478 = vrot.lane.b32.xlu0 %v1477, 127
    %v1479 = vpop.permute.xlu0 %1478
    %1480 = vrot.lane.b32.xlu0 %v1476, 127
    %v1481 = vpop.permute.xlu0 %1480
    %v1484 = vadd.f32 %v1428, %v1479
    %v1485 = vadd.f32 %v1429, %v1481
    %s1486 = sld [smem:[#allocation2 + $0x3d]]
    %v1487 = vstv %s1486
    %v1488 = vmul.f32 %v1487, %v1091
    %v1489 = vmul.f32 %v1487, %v1092
    %v1492 = vrot.slane %v1488, 2
    %v1493 = vrot.slane %v1489, 2
    %v1494 = vsel %vm392, %v1492, %v1493
    %1495 = vrot.lane.b32.xlu0 %v1494, 127
    %v1496 = vpop.permute.xlu0 %1495
    %1497 = vrot.lane.b32.xlu0 %v1493, 127
    %v1498 = vpop.permute.xlu0 %1497
    %v1501 = vadd.f32 %v1441, %v1496
    %v1502 = vadd.f32 %v1442, %v1498
    %s1503 = sld [smem:[#allocation2 + $0x61]]
    %v1504 = vstv %s1503
    %v1505 = vmul.f32 %v1504, %v1091
    %v1506 = vmul.f32 %v1504, %v1092
    %v1509 = vrot.slane %v1505, 2
    %v1510 = vrot.slane %v1506, 2
    %v1511 = vsel %vm392, %v1509, %v1510
    %1512 = vrot.lane.b32.xlu0 %v1511, 127
    %v1513 = vpop.permute.xlu0 %1512
    %1514 = vrot.lane.b32.xlu0 %v1510, 127
    %v1515 = vpop.permute.xlu0 %1514
    %v1518 = vadd.f32 %v1454, %v1513
    %v1519 = vadd.f32 %v1455, %v1515
    %s1520 = sld [smem:[#allocation2 + $0x85]]
    %v1521 = vstv %s1520
    %v1522 = vmul.f32 %v1521, %v1091
    %v1523 = vmul.f32 %v1521, %v1092
    %v1526 = vrot.slane %v1522, 2
    %v1527 = vrot.slane %v1523, 2
    %v1528 = vsel %vm392, %v1526, %v1527
    %1529 = vrot.lane.b32.xlu0 %v1528, 127
    %v1530 = vpop.permute.xlu0 %1529
    %1531 = vrot.lane.b32.xlu0 %v1527, 127
    %v1532 = vpop.permute.xlu0 %1531
    %v1535 = vadd.f32 %v1467, %v1530
    %v1536 = vadd.f32 %v1468, %v1532
    %s1537 = sld [smem:[#allocation2 + $0x1a]]
    %v1538 = vstv %s1537
    %v1539 = vmul.f32 %v1538, %v1091
    %v1540 = vmul.f32 %v1538, %v1092
    %v1543 = vrot.slane %v1539, 2
    %v1544 = vrot.slane %v1540, 2
    %v1545 = vsel %vm392, %v1543, %v1544
    %1546 = vrot.lane.b32.xlu0 %v1545, 126
    %v1547 = vpop.permute.xlu0 %1546
    %1548 = vrot.lane.b32.xlu0 %v1544, 126
    %v1549 = vpop.permute.xlu0 %1548
    %v1552 = vadd.f32 %v1484, %v1547
    %v1553 = vadd.f32 %v1485, %v1549
    %s1554 = sld [smem:[#allocation2 + $0x3e]]
    %v1555 = vstv %s1554
    %v1556 = vmul.f32 %v1555, %v1091
    %v1557 = vmul.f32 %v1555, %v1092
    %v1560 = vrot.slane %v1556, 2
    %v1561 = vrot.slane %v1557, 2
    %v1562 = vsel %vm392, %v1560, %v1561
    %1563 = vrot.lane.b32.xlu0 %v1562, 126
    %v1564 = vpop.permute.xlu0 %1563
    %1565 = vrot.lane.b32.xlu0 %v1561, 126
    %v1566 = vpop.permute.xlu0 %1565
    %v1569 = vadd.f32 %v1501, %v1564
    %v1570 = vadd.f32 %v1502, %v1566
    %s1571 = sld [smem:[#allocation2 + $0x62]]
    %v1572 = vstv %s1571
    %v1573 = vmul.f32 %v1572, %v1091
    %v1574 = vmul.f32 %v1572, %v1092
    %v1577 = vrot.slane %v1573, 2
    %v1578 = vrot.slane %v1574, 2
    %v1579 = vsel %vm392, %v1577, %v1578
    %1580 = vrot.lane.b32.xlu0 %v1579, 126
    %v1581 = vpop.permute.xlu0 %1580
    %1582 = vrot.lane.b32.xlu0 %v1578, 126
    %v1583 = vpop.permute.xlu0 %1582
    %v1586 = vadd.f32 %v1518, %v1581
    %v1587 = vadd.f32 %v1519, %v1583
    %s1588 = sld [smem:[#allocation2 + $0x86]]
    %v1589 = vstv %s1588
    %v1590 = vmul.f32 %v1589, %v1091
    %v1591 = vmul.f32 %v1589, %v1092
    %v1594 = vrot.slane %v1590, 2
    %v1595 = vrot.slane %v1591, 2
    %v1596 = vsel %vm392, %v1594, %v1595
    %1597 = vrot.lane.b32.xlu0 %v1596, 126
    %v1598 = vpop.permute.xlu0 %1597
    %1599 = vrot.lane.b32.xlu0 %v1595, 126
    %v1600 = vpop.permute.xlu0 %1599
    %v1603 = vadd.f32 %v1535, %v1598
    %v1604 = vadd.f32 %v1536, %v1600
    %s1605 = scalar_lea.vmem [#allocation7], 48
    %v1606 = vld [vmem:[%s1605] sm:$0xff]
    %v1607 = vld [vmem:[%s1605 + $0x8] sm:$0xff]
    %s1608 = sld [smem:[#allocation2 + $0x1b]]
    %v1609 = vstv %s1608
    %v1610 = vmul.f32 %v1609, %v1606
    %v1611 = vmul.f32 %v1609, %v1607
    %v1612 = vadd.f32 %v1552, %v1610
    %v1613 = vadd.f32 %v1553, %v1611
    %s1614 = sld [smem:[#allocation2 + $0x3f]]
    %v1615 = vstv %s1614
    %v1616 = vmul.f32 %v1615, %v1606
    %v1617 = vmul.f32 %v1615, %v1607
    %v1618 = vadd.f32 %v1569, %v1616
    %v1619 = vadd.f32 %v1570, %v1617
    %s1620 = sld [smem:[#allocation2 + $0x63]]
    %v1621 = vstv %s1620
    %v1622 = vmul.f32 %v1621, %v1606
    %v1623 = vmul.f32 %v1621, %v1607
    %v1624 = vadd.f32 %v1586, %v1622
    %v1625 = vadd.f32 %v1587, %v1623
    %s1626 = sld [smem:[#allocation2 + $0x87]]
    %v1627 = vstv %s1626
    %v1628 = vmul.f32 %v1627, %v1606
    %v1629 = vmul.f32 %v1627, %v1607
    %v1630 = vadd.f32 %v1603, %v1628
    %v1631 = vadd.f32 %v1604, %v1629
    %s1632 = sld [smem:[#allocation2 + $0x1c]]
    %v1633 = vstv %s1632
    %v1634 = vmul.f32 %v1633, %v1606
    %v1635 = vmul.f32 %v1633, %v1607
    %1638 = vrot.lane.b32.xlu0 %v1634, 127
    %v1639 = vpop.permute.xlu0 %1638
    %1640 = vrot.lane.b32.xlu0 %v1635, 127
    %v1641 = vpop.permute.xlu0 %1640
    %v1644 = vadd.f32 %v1612, %v1639
    %v1645 = vadd.f32 %v1613, %v1641
    %s1646 = sld [smem:[#allocation2 + $0x40]]
    %v1647 = vstv %s1646
    %v1648 = vmul.f32 %v1647, %v1606
    %v1649 = vmul.f32 %v1647, %v1607
    %1652 = vrot.lane.b32.xlu0 %v1648, 127
    %v1653 = vpop.permute.xlu0 %1652
    %1654 = vrot.lane.b32.xlu0 %v1649, 127
    %v1655 = vpop.permute.xlu0 %1654
    %v1658 = vadd.f32 %v1618, %v1653
    %v1659 = vadd.f32 %v1619, %v1655
    %s1660 = sld [smem:[#allocation2 + $0x64]]
    %v1661 = vstv %s1660
    %v1662 = vmul.f32 %v1661, %v1606
    %v1663 = vmul.f32 %v1661, %v1607
    %1666 = vrot.lane.b32.xlu0 %v1662, 127
    %v1667 = vpop.permute.xlu0 %1666
    %1668 = vrot.lane.b32.xlu0 %v1663, 127
    %v1669 = vpop.permute.xlu0 %1668
    %v1672 = vadd.f32 %v1624, %v1667
    %v1673 = vadd.f32 %v1625, %v1669
    %s1674 = sld [smem:[#allocation2 + $0x88]]
    %v1675 = vstv %s1674
    %v1676 = vmul.f32 %v1675, %v1606
    %v1677 = vmul.f32 %v1675, %v1607
    %1680 = vrot.lane.b32.xlu0 %v1676, 127
    %v1681 = vpop.permute.xlu0 %1680
    %1682 = vrot.lane.b32.xlu0 %v1677, 127
    %v1683 = vpop.permute.xlu0 %1682
    %v1686 = vadd.f32 %v1630, %v1681
    %v1687 = vadd.f32 %v1631, %v1683
    %s1688 = sld [smem:[#allocation2 + $0x1d]]
    %v1689 = vstv %s1688
    %v1690 = vmul.f32 %v1689, %v1606
    %v1691 = vmul.f32 %v1689, %v1607
    %1694 = vrot.lane.b32.xlu0 %v1690, 126
    %v1695 = vpop.permute.xlu0 %1694
    %1696 = vrot.lane.b32.xlu0 %v1691, 126
    %v1697 = vpop.permute.xlu0 %1696
    %v1700 = vadd.f32 %v1644, %v1695
    %v1701 = vadd.f32 %v1645, %v1697
    %s1702 = sld [smem:[#allocation2 + $0x41]]
    %v1703 = vstv %s1702
    %v1704 = vmul.f32 %v1703, %v1606
    %v1705 = vmul.f32 %v1703, %v1607
    %1708 = vrot.lane.b32.xlu0 %v1704, 126
    %v1709 = vpop.permute.xlu0 %1708
    %1710 = vrot.lane.b32.xlu0 %v1705, 126
    %v1711 = vpop.permute.xlu0 %1710
    %v1714 = vadd.f32 %v1658, %v1709
    %v1715 = vadd.f32 %v1659, %v1711
    %s1716 = sld [smem:[#allocation2 + $0x65]]
    %v1717 = vstv %s1716
    %v1718 = vmul.f32 %v1717, %v1606
    %v1719 = vmul.f32 %v1717, %v1607
    %1722 = vrot.lane.b32.xlu0 %v1718, 126
    %v1723 = vpop.permute.xlu0 %1722
    %1724 = vrot.lane.b32.xlu0 %v1719, 126
    %v1725 = vpop.permute.xlu0 %1724
    %v1728 = vadd.f32 %v1672, %v1723
    %v1729 = vadd.f32 %v1673, %v1725
    %s1730 = sld [smem:[#allocation2 + $0x89]]
    %v1731 = vstv %s1730
    %v1732 = vmul.f32 %v1731, %v1606
    %v1733 = vmul.f32 %v1731, %v1607
    %1736 = vrot.lane.b32.xlu0 %v1732, 126
    %v1737 = vpop.permute.xlu0 %1736
    %1738 = vrot.lane.b32.xlu0 %v1733, 126
    %v1739 = vpop.permute.xlu0 %1738
    %v1742 = vadd.f32 %v1686, %v1737
    %v1743 = vadd.f32 %v1687, %v1739
    %s1744 = sld [smem:[#allocation2 + $0x1e]]
    %v1745 = vstv %s1744
    %v1746 = vmul.f32 %v1745, %v1606
    %v1747 = vmul.f32 %v1745, %v1607
    %v1750 = vrot.slane %v1746, 1
    %v1751 = vrot.slane %v1747, 1
    %v1752 = vsel %vm203, %v1750, %v1751
    %v1755 = vadd.f32 %v1700, %v1752
    %v1756 = vadd.f32 %v1701, %v1751
    %s1757 = sld [smem:[#allocation2 + $0x42]]
    %v1758 = vstv %s1757
    %v1759 = vmul.f32 %v1758, %v1606
    %v1760 = vmul.f32 %v1758, %v1607
    %v1763 = vrot.slane %v1759, 1
    %v1764 = vrot.slane %v1760, 1
    %v1765 = vsel %vm203, %v1763, %v1764
    %v1768 = vadd.f32 %v1714, %v1765
    %v1769 = vadd.f32 %v1715, %v1764
    %s1770 = sld [smem:[#allocation2 + $0x66]]
    %v1771 = vstv %s1770
    %v1772 = vmul.f32 %v1771, %v1606
    %v1773 = vmul.f32 %v1771, %v1607
    %v1776 = vrot.slane %v1772, 1
    %v1777 = vrot.slane %v1773, 1
    %v1778 = vsel %vm203, %v1776, %v1777
    %v1781 = vadd.f32 %v1728, %v1778
    %v1782 = vadd.f32 %v1729, %v1777
    %s1783 = sld [smem:[#allocation2 + $0x8a]]
    %v1784 = vstv %s1783
    %v1785 = vmul.f32 %v1784, %v1606
    %v1786 = vmul.f32 %v1784, %v1607
    %v1789 = vrot.slane %v1785, 1
    %v1790 = vrot.slane %v1786, 1
    %v1791 = vsel %vm203, %v1789, %v1790
    %v1794 = vadd.f32 %v1742, %v1791
    %v1795 = vadd.f32 %v1743, %v1790
    %s1796 = sld [smem:[#allocation2 + $0x1f]]
    %v1797 = vstv %s1796
    %v1798 = vmul.f32 %v1797, %v1606
    %v1799 = vmul.f32 %v1797, %v1607
    %v1802 = vrot.slane %v1798, 1
    %v1803 = vrot.slane %v1799, 1
    %v1804 = vsel %vm203, %v1802, %v1803
    %1805 = vrot.lane.b32.xlu0 %v1804, 127
    %v1806 = vpop.permute.xlu0 %1805
    %1807 = vrot.lane.b32.xlu0 %v1803, 127
    %v1808 = vpop.permute.xlu0 %1807
    %v1811 = vadd.f32 %v1755, %v1806
    %v1812 = vadd.f32 %v1756, %v1808
    %s1813 = sld [smem:[#allocation2 + $0x43]]
    %v1814 = vstv %s1813
    %v1815 = vmul.f32 %v1814, %v1606
    %v1816 = vmul.f32 %v1814, %v1607
    %v1819 = vrot.slane %v1815, 1
    %v1820 = vrot.slane %v1816, 1
    %v1821 = vsel %vm203, %v1819, %v1820
    %1822 = vrot.lane.b32.xlu0 %v1821, 127
    %v1823 = vpop.permute.xlu0 %1822
    %1824 = vrot.lane.b32.xlu0 %v1820, 127
    %v1825 = vpop.permute.xlu0 %1824
    %v1828 = vadd.f32 %v1768, %v1823
    %v1829 = vadd.f32 %v1769, %v1825
    %s1830 = sld [smem:[#allocation2 + $0x67]]
    %v1831 = vstv %s1830
    %v1832 = vmul.f32 %v1831, %v1606
    %v1833 = vmul.f32 %v1831, %v1607
    %v1836 = vrot.slane %v1832, 1
    %v1837 = vrot.slane %v1833, 1
    %v1838 = vsel %vm203, %v1836, %v1837
    %1839 = vrot.lane.b32.xlu0 %v1838, 127
    %v1840 = vpop.permute.xlu0 %1839
    %1841 = vrot.lane.b32.xlu0 %v1837, 127
    %v1842 = vpop.permute.xlu0 %1841
    %v1845 = vadd.f32 %v1781, %v1840
    %v1846 = vadd.f32 %v1782, %v1842
    %s1847 = sld [smem:[#allocation2 + $0x8b]]
    %v1848 = vstv %s1847
    %v1849 = vmul.f32 %v1848, %v1606
    %v1850 = vmul.f32 %v1848, %v1607
    %v1853 = vrot.slane %v1849, 1
    %v1854 = vrot.slane %v1850, 1
    %v1855 = vsel %vm203, %v1853, %v1854
    %1856 = vrot.lane.b32.xlu0 %v1855, 127
    %v1857 = vpop.permute.xlu0 %1856
    %1858 = vrot.lane.b32.xlu0 %v1854, 127
    %v1859 = vpop.permute.xlu0 %1858
    %v1862 = vadd.f32 %v1794, %v1857
    %v1863 = vadd.f32 %v1795, %v1859
    %s1864 = sld [smem:[#allocation2 + $0x20]]
    %v1865 = vstv %s1864
    %v1866 = vmul.f32 %v1865, %v1606
    %v1867 = vmul.f32 %v1865, %v1607
    %v1870 = vrot.slane %v1866, 1
    %v1871 = vrot.slane %v1867, 1
    %v1872 = vsel %vm203, %v1870, %v1871
    %1873 = vrot.lane.b32.xlu0 %v1872, 126
    %v1874 = vpop.permute.xlu0 %1873
    %1875 = vrot.lane.b32.xlu0 %v1871, 126
    %v1876 = vpop.permute.xlu0 %1875
    %v1879 = vadd.f32 %v1811, %v1874
    %v1880 = vadd.f32 %v1812, %v1876
    %s1881 = sld [smem:[#allocation2 + $0x44]]
    %v1882 = vstv %s1881
    %v1883 = vmul.f32 %v1882, %v1606
    %v1884 = vmul.f32 %v1882, %v1607
    %v1887 = vrot.slane %v1883, 1
    %v1888 = vrot.slane %v1884, 1
    %v1889 = vsel %vm203, %v1887, %v1888
    %1890 = vrot.lane.b32.xlu0 %v1889, 126
    %v1891 = vpop.permute.xlu0 %1890
    %1892 = vrot.lane.b32.xlu0 %v1888, 126
    %v1893 = vpop.permute.xlu0 %1892
    %v1896 = vadd.f32 %v1828, %v1891
    %v1897 = vadd.f32 %v1829, %v1893
    %s1898 = sld [smem:[#allocation2 + $0x68]]
    %v1899 = vstv %s1898
    %v1900 = vmul.f32 %v1899, %v1606
    %v1901 = vmul.f32 %v1899, %v1607
    %v1904 = vrot.slane %v1900, 1
    %v1905 = vrot.slane %v1901, 1
    %v1906 = vsel %vm203, %v1904, %v1905
    %1907 = vrot.lane.b32.xlu0 %v1906, 126
    %v1908 = vpop.permute.xlu0 %1907
    %1909 = vrot.lane.b32.xlu0 %v1905, 126
    %v1910 = vpop.permute.xlu0 %1909
    %v1913 = vadd.f32 %v1845, %v1908
    %v1914 = vadd.f32 %v1846, %v1910
    %s1915 = sld [smem:[#allocation2 + $0x8c]]
    %v1916 = vstv %s1915
    %v1917 = vmul.f32 %v1916, %v1606
    %v1918 = vmul.f32 %v1916, %v1607
    %v1921 = vrot.slane %v1917, 1
    %v1922 = vrot.slane %v1918, 1
    %v1923 = vsel %vm203, %v1921, %v1922
    %1924 = vrot.lane.b32.xlu0 %v1923, 126
    %v1925 = vpop.permute.xlu0 %1924
    %1926 = vrot.lane.b32.xlu0 %v1922, 126
    %v1927 = vpop.permute.xlu0 %1926
    %v1930 = vadd.f32 %v1862, %v1925
    %v1931 = vadd.f32 %v1863, %v1927
    %s1932 = sld [smem:[#allocation2 + $0x21]]
    %v1933 = vstv %s1932
    %v1934 = vmul.f32 %v1933, %v1606
    %v1935 = vmul.f32 %v1933, %v1607
    %v1938 = vrot.slane %v1934, 2
    %v1939 = vrot.slane %v1935, 2
    %v1940 = vsel %vm392, %v1938, %v1939
    %v1943 = vadd.f32 %v1879, %v1940
    %v1944 = vadd.f32 %v1880, %v1939
    %s1945 = sld [smem:[#allocation2 + $0x45]]
    %v1946 = vstv %s1945
    %v1947 = vmul.f32 %v1946, %v1606
    %v1948 = vmul.f32 %v1946, %v1607
    %v1951 = vrot.slane %v1947, 2
    %v1952 = vrot.slane %v1948, 2
    %v1953 = vsel %vm392, %v1951, %v1952
    %v1956 = vadd.f32 %v1896, %v1953
    %v1957 = vadd.f32 %v1897, %v1952
    %s1958 = sld [smem:[#allocation2 + $0x69]]
    %v1959 = vstv %s1958
    %v1960 = vmul.f32 %v1959, %v1606
    %v1961 = vmul.f32 %v1959, %v1607
    %v1964 = vrot.slane %v1960, 2
    %v1965 = vrot.slane %v1961, 2
    %v1966 = vsel %vm392, %v1964, %v1965
    %v1969 = vadd.f32 %v1913, %v1966
    %v1970 = vadd.f32 %v1914, %v1965
    %s1971 = sld [smem:[#allocation2 + $0x8d]]
    %v1972 = vstv %s1971
    %v1973 = vmul.f32 %v1972, %v1606
    %v1974 = vmul.f32 %v1972, %v1607
    %v1977 = vrot.slane %v1973, 2
    %v1978 = vrot.slane %v1974, 2
    %v1979 = vsel %vm392, %v1977, %v1978
    %v1982 = vadd.f32 %v1930, %v1979
    %v1983 = vadd.f32 %v1931, %v1978
    %s1984 = sld [smem:[#allocation2 + $0x22]]
    %v1985 = vstv %s1984
    %v1986 = vmul.f32 %v1985, %v1606
    %v1987 = vmul.f32 %v1985, %v1607
    %v1990 = vrot.slane %v1986, 2
    %v1991 = vrot.slane %v1987, 2
    %v1992 = vsel %vm392, %v1990, %v1991
    %1993 = vrot.lane.b32.xlu0 %v1992, 127
    %v1994 = vpop.permute.xlu0 %1993
    %1995 = vrot.lane.b32.xlu0 %v1991, 127
    %v1996 = vpop.permute.xlu0 %1995
    %v1999 = vadd.f32 %v1943, %v1994
    %v2000 = vadd.f32 %v1944, %v1996
    %s2001 = sld [smem:[#allocation2 + $0x46]]
    %v2002 = vstv %s2001
    %v2003 = vmul.f32 %v2002, %v1606
    %v2004 = vmul.f32 %v2002, %v1607
    %v2007 = vrot.slane %v2003, 2
    %v2008 = vrot.slane %v2004, 2
    %v2009 = vsel %vm392, %v2007, %v2008
    %2010 = vrot.lane.b32.xlu0 %v2009, 127
    %v2011 = vpop.permute.xlu0 %2010
    %2012 = vrot.lane.b32.xlu0 %v2008, 127
    %v2013 = vpop.permute.xlu0 %2012
    %v2016 = vadd.f32 %v1956, %v2011
    %v2017 = vadd.f32 %v1957, %v2013
    %s2018 = sld [smem:[#allocation2 + $0x6a]]
    %v2019 = vstv %s2018
    %v2020 = vmul.f32 %v2019, %v1606
    %v2021 = vmul.f32 %v2019, %v1607
    %v2024 = vrot.slane %v2020, 2
    %v2025 = vrot.slane %v2021, 2
    %v2026 = vsel %vm392, %v2024, %v2025
    %2027 = vrot.lane.b32.xlu0 %v2026, 127
    %v2028 = vpop.permute.xlu0 %2027
    %2029 = vrot.lane.b32.xlu0 %v2025, 127
    %v2030 = vpop.permute.xlu0 %2029
    %v2033 = vadd.f32 %v1969, %v2028
    %v2034 = vadd.f32 %v1970, %v2030
    %s2035 = sld [smem:[#allocation2 + $0x8e]]
    %v2036 = vstv %s2035
    %v2037 = vmul.f32 %v2036, %v1606
    %v2038 = vmul.f32 %v2036, %v1607
    %v2041 = vrot.slane %v2037, 2
    %v2042 = vrot.slane %v2038, 2
    %v2043 = vsel %vm392, %v2041, %v2042
    %2044 = vrot.lane.b32.xlu0 %v2043, 127
    %v2045 = vpop.permute.xlu0 %2044
    %2046 = vrot.lane.b32.xlu0 %v2042, 127
    %v2047 = vpop.permute.xlu0 %2046
    %v2050 = vadd.f32 %v1982, %v2045
    %v2051 = vadd.f32 %v1983, %v2047
    %s2052 = sld [smem:[#allocation2 + $0x23]]
    %v2053 = vstv %s2052
    %v2054 = vmul.f32 %v2053, %v1606
    %v2055 = vmul.f32 %v2053, %v1607
    %v2058 = vrot.slane %v2054, 2
    %v2059 = vrot.slane %v2055, 2
    %v2060 = vsel %vm392, %v2058, %v2059
    %2061 = vrot.lane.b32.xlu0 %v2060, 126
    %v2062 = vpop.permute.xlu0 %2061
    %2063 = vrot.lane.b32.xlu0 %v2059, 126
    %v2064 = vpop.permute.xlu0 %2063
    %v2067 = vadd.f32 %v1999, %v2062
    %v2068 = vadd.f32 %v2000, %v2064
    %s2069 = sld [smem:[#allocation2 + $0x47]]
    %v2070 = vstv %s2069
    %v2071 = vmul.f32 %v2070, %v1606
    %v2072 = vmul.f32 %v2070, %v1607
    %v2075 = vrot.slane %v2071, 2
    %v2076 = vrot.slane %v2072, 2
    %v2077 = vsel %vm392, %v2075, %v2076
    %2078 = vrot.lane.b32.xlu0 %v2077, 126
    %v2079 = vpop.permute.xlu0 %2078
    %2080 = vrot.lane.b32.xlu0 %v2076, 126
    %v2081 = vpop.permute.xlu0 %2080
    %v2084 = vadd.f32 %v2016, %v2079
    %v2085 = vadd.f32 %v2017, %v2081
    %s2086 = sld [smem:[#allocation2 + $0x6b]]
    %v2087 = vstv %s2086
    %v2088 = vmul.f32 %v2087, %v1606
    %v2089 = vmul.f32 %v2087, %v1607
    %v2092 = vrot.slane %v2088, 2
    %v2093 = vrot.slane %v2089, 2
    %v2094 = vsel %vm392, %v2092, %v2093
    %2095 = vrot.lane.b32.xlu0 %v2094, 126
    %v2096 = vpop.permute.xlu0 %2095
    %2097 = vrot.lane.b32.xlu0 %v2093, 126
    %v2098 = vpop.permute.xlu0 %2097
    %v2101 = vadd.f32 %v2033, %v2096
    %v2102 = vadd.f32 %v2034, %v2098
    %s2103 = sld [smem:[#allocation2 + $0x8f]]
    %v2104 = vstv %s2103
    %v2105 = vmul.f32 %v2104, %v1606
    %v2106 = vmul.f32 %v2104, %v1607
    %v2109 = vrot.slane %v2105, 2
    %v2110 = vrot.slane %v2106, 2
    %v2111 = vsel %vm392, %v2109, %v2110
    %2112 = vrot.lane.b32.xlu0 %v2111, 126
    %v2113 = vpop.permute.xlu0 %2112
    %2114 = vrot.lane.b32.xlu0 %v2110, 126
    %v2115 = vpop.permute.xlu0 %2114
    %v2118 = vadd.f32 %v2050, %v2113
    %v2119 = vadd.f32 %v2051, %v2115
    %vm2120 = vcmask 261120
    %2121 = vst.msk [vmem:[%s3] sm:$0xff] %vm2120, %v2067
    %vm2122 = vcmask 259072
    %2123 = vst.msk [vmem:[%s3 + $0x8] sm:$0x3f] %vm2122, %v2068
    %s2124 = scalar_lea.vmem %s3, 16
    %2125 = vst.msk [vmem:[%s2124] sm:$0xff] %vm2120, %v2084
    %2126 = vst.msk [vmem:[%s2124 + $0x8] sm:$0x3f] %vm2122, %v2085
    %s2127 = scalar_lea.vmem %s3, 32
    %2128 = vst.msk [vmem:[%s2127] sm:$0xff] %vm2120, %v2101
    %2129 = vst.msk [vmem:[%s2127 + $0x8] sm:$0x3f] %vm2122, %v2102
    %s2130 = scalar_lea.vmem %s3, 48
    %2131 = vst.msk [vmem:[%s2130] sm:$0xff] %vm2120, %v2118
    %2132 = vst.msk [vmem:[%s2130 + $0x8] sm:$0x3f] %vm2122, %v2119
    // Predicated region
    $region26: #{tpu_custom_call.1} parent=1 // pred_check
      _
    $region27: #{tpu_custom_call.1} parent=1 // pred_check_branch
      %2134 = sbr.rel (0) target = $region29
    $region28: #{tpu_custom_call.1} parent=1 // pred_region
      _
    $region29: #{tpu_custom_call.1} parent=1 // pred_fallthru
      _
    // Predicated region
    $region30: #{tpu_custom_call.1} parent=1 // pred_check
      _
    $region31: #{tpu_custom_call.1} parent=1 // pred_check_branch
      %2136 = sbr.rel (0) target = $region33
    $region32: #{tpu_custom_call.1} parent=1 // pred_region
      _
    $region33: #{tpu_custom_call.1} parent=1 // pred_fallthru
      _
    %2137 = vsyncpa [#allocation3], 1
    %2138 = vsyncpa [#allocation4], 1
    %2139 = vsyncpa [#allocation5], 1

</llo_original>
